<compile_context>
chip_gen: v5e
topology: v5e:2x2
jax: 0.10.0
libtpu: 0.0.40
codegen_flags: <defaults>
</compile_context>

<pallas_src>
import functools

import jax
import jax.numpy as jnp
from jax.experimental import pallas as pl
from jax.experimental.pallas import tpu as pltpu


# ---- static layout constants (lane = 128, sublane = 8, bf16 tile = (16,128)) -
LANES = 128
NEG_INF = -1e30  # representable in bf16; exp(NEG_INF - m) underflows to exactly 0

# Row offsets of each piece inside the packed (PACK_ROWS, 128) bf16 slab.
# Every piece starts on a 16-row boundary (bf16 packs 2 rows per sublane).
_W1_OFF, _W2_OFF, _W3_OFF = 0, 128, 256
_B1_OFF, _B2_OFF, _B3_OFF = 384, 400, 416
PACK_ROWS = 432  # multiple of 16


def _pad2d(a, rows, cols):
    a = jnp.asarray(a, jnp.float32)
    return jnp.pad(a, ((0, rows - a.shape[0]), (0, cols - a.shape[1])))


def pack_params(params):
    """Pack (w1, b1, w2, b2, w3, b3) into ONE lane-aligned bf16 slab (done once).

    Zero padding of input / hidden lanes is exact (contributes 0 to every dot).
    The softmax action-lane mask is baked into the b3 row: padded action lanes
    get NEG_INF, so the kernel needs no iota / compare / select.
    """
    w1, b1, w2, b2, w3, b3 = params
    action_dim = w3.shape[-1]
    slab = jnp.zeros((PACK_ROWS, LANES), jnp.float32)
    slab = slab.at[_W1_OFF:_W1_OFF + 128, :].set(_pad2d(w1, 128, LANES))
    slab = slab.at[_W2_OFF:_W2_OFF + 128, :].set(_pad2d(w2, 128, LANES))
    slab = slab.at[_W3_OFF:_W3_OFF + 128, :].set(_pad2d(w3, 128, LANES))
    slab = slab.at[_B1_OFF, :].set(_pad2d(jnp.reshape(b1, (1, -1)), 1, LANES)[0])
    slab = slab.at[_B2_OFF, :].set(_pad2d(jnp.reshape(b2, (1, -1)), 1, LANES)[0])
    b3_row = jnp.full((LANES,), NEG_INF, jnp.float32).at[:action_dim].set(
        jnp.asarray(b3, jnp.float32).reshape(-1))
    slab = slab.at[_B3_OFF, :].set(b3_row)
    return slab.astype(jnp.bfloat16)


def policy_kernel(x_ref, w_ref, o_ref):
    # bf16 MXU operands, f32 accumulation and f32 epilogue (safe on v5e too).
    x = x_ref[...].astype(jnp.bfloat16)                       # (tile, 128)
    # Static slices of the resident bf16 slab (zero-cost views, 16-row aligned).
    w1 = w_ref[_W1_OFF:_W1_OFF + 128, :]
    w2 = w_ref[_W2_OFF:_W2_OFF + 128, :]
    w3 = w_ref[_W3_OFF:_W3_OFF + 128, :]
    b1 = w_ref[_B1_OFF:_B1_OFF + 1, :].astype(jnp.float32)    # (1, 128)
    b2 = w_ref[_B2_OFF:_B2_OFF + 1, :].astype(jnp.float32)
    b3 = w_ref[_B3_OFF:_B3_OFF + 1, :].astype(jnp.float32)    # action mask baked in

    h1 = jnp.maximum(jnp.dot(x, w1, preferred_element_type=jnp.float32) + b1, 0.0)
    h2 = jnp.maximum(
        jnp.dot(h1.astype(jnp.bfloat16), w2, preferred_element_type=jnp.float32) + b2,
        0.0)
    logits = jnp.dot(h2.astype(jnp.bfloat16), w3,
                     preferred_element_type=jnp.float32) + b3

    # Numerically stable softmax; padded lanes hold NEG_INF -> exp == 0 exactly.
    m = jnp.max(logits, axis=-1, keepdims=True)
    e = jnp.exp(logits - m)
    s = jnp.sum(e, axis=-1, keepdims=True)
    # Exact reciprocal: rows must sum to 1 (Categorical sampling downstream).
    o_ref[...] = e * pl.reciprocal(s, approx=False)           # lane-dense store


def _pick_tile(batch):
    # 256-row tiles fill the 256-wide MXU M dim on v6e/v7x and halve the number
    # of per-grid-step overheads; keep >= 2 grid tiles whenever the batch
    # allows so the "parallel" axis can shard across v7x's two TensorCores.
    return 256 if batch >= 512 else 128


@functools.partial(jax.jit, static_argnames=("action_dim",))
def policy_forward(x, packed_w, action_dim):
    """x: (batch, state_dim) f32; packed_w: pack_params(...) bf16 slab."""
    batch, state_dim = x.shape
    assert state_dim <= LANES
    tile = _pick_tile(batch)
    padded_b = pl.cdiv(batch, tile) * tile
    # Single fused pad (no zeros().at[].set() round trip in HBM).
    x_pad = jnp.pad(x.astype(jnp.float32),
                    ((0, padded_b - batch), (0, LANES - state_dim)))

    out_pad = pl.pallas_call(
        policy_kernel,
        out_shape=jax.ShapeDtypeStruct((padded_b, LANES), jnp.float32),
        grid=(padded_b // tile,),
        in_specs=[
            pl.BlockSpec((tile, LANES), lambda i: (i, 0)),        # x batch tile
            # Constant block index + single buffer: the bf16 slab is DMA'd once
            # and stays resident in VMEM for the whole call.
            pl.BlockSpec((PACK_ROWS, LANES), lambda i: (0, 0),
                         pipeline_mode=pl.Buffered(1)),
        ],
        out_specs=pl.BlockSpec((tile, LANES), lambda i: (i, 0)),
        compiler_params=pltpu.CompilerParams(
            dimension_semantics=("parallel",),   # shard batch tiles across TCs
        ),
    )(x_pad, packed_w)
    # TODO(synk): on v5e a narrow (tile, action_dim) masked-store out_spec would
    # cut output HBM writes 16x; lane-dense store kept for v6e/v7x.
    return out_pad[:batch, :action_dim]


def init_params(key, state_dim, action_dim):
    """Deterministic synthetic init. Weights stored as (in, out) = PyTorch W.T."""
    k1, k2, k3, k4, k5, k6 = jax.random.split(key, 6)
    s1 = 1.0 / jnp.sqrt(state_dim)
    s2 = 1.0 / jnp.sqrt(64.0)
    s3 = 1.0 / jnp.sqrt(32.0)
    w1 = jax.random.uniform(k1, (state_dim, 64), jnp.float32, -s1, s1)
    b1 = jax.random.uniform(k2, (1, 64), jnp.float32, -s1, s1)
    w2 = jax.random.uniform(k3, (64, 32), jnp.float32, -s2, s2)
    b2 = jax.random.uniform(k4, (1, 32), jnp.float32, -s2, s2)
    w3 = jax.random.uniform(k5, (32, action_dim), jnp.float32, -s3, s3)
    b3 = jax.random.uniform(k6, (1, action_dim), jnp.float32, -s3, s3)
    return (w1, b1, w2, b2, w3, b3)


def policy_reference(x, params):
    w1, b1, w2, b2, w3, b3 = params
    h1 = jnp.maximum(x @ w1 + b1, 0.0)
    h2 = jnp.maximum(h1 @ w2 + b2, 0.0)
    return jax.nn.softmax(h2 @ w3 + b3, axis=-1)


# TODO(synk): Policy.act (Categorical sampling + log_prob) is host-side control
# logic outside the forward pass; it is intentionally not implemented in-kernel.

if __name__ == "__main__":
    state_dim = 32
    action_dim = 8
    batch = 512  # 2 grid tiles of 256 rows: full MXU M fill, both v7x TCs busy

    key = jax.random.PRNGKey(0)
    kx, kp = jax.random.split(key)
    x = jax.random.normal(kx, (batch, state_dim), jnp.float32)
    params = init_params(kp, state_dim, action_dim)

    packed_w = pack_params(params)          # pack / pad / cast to bf16 once
    jax.block_until_ready(packed_w)

    action_probs = policy_forward(x, packed_w, action_dim)
    jax.block_until_ready(action_probs)

    ref = policy_reference(x, params)
    assert action_probs.shape == (batch, action_dim)
    # bf16 matmul operands (f32 accumulation) -> a few e-3 abs error vs f32 ref.
    assert jnp.allclose(action_probs, ref, atol=5e-3, rtol=5e-3), float(
        jnp.max(jnp.abs(action_probs - ref)))
    # Exact reciprocal in the softmax -> rows sum to 1 to f32 rounding.
    assert jnp.allclose(jnp.sum(action_probs, axis=-1), 1.0, atol=1e-4)

    print("KERNEL_OK")
</pallas_src>

<mosaic_0001>
module attributes {stable_mosaic.version = 11 : i64} {
  func.func @policy_kernel(%arg0: i32, %arg1: memref<256x128xf32, #tpu.memory_space<vmem>>, %arg2: memref<432x128xbf16, #tpu.memory_space<vmem>>, %arg3: memref<256x128xf32, #tpu.memory_space<vmem>>) attributes {dimension_semantics = [#tpu.dimension_semantics<parallel>], iteration_bounds = array<i64: 2>, scalar_prefetch = 0 : i64, scratch_operands = 0 : i64, tpu.core_type = #tpu.core_type<tc>, window_params = [{transform_indices = @transform_0, window_bounds = array<i64: 256, 128>}, {pipeline_mode = #tpu.pipeline_mode<synchronous>, transform_indices = @transform_1, window_bounds = array<i64: 432, 128>}, {transform_indices = @transform_2, window_bounds = array<i64: 256, 128>}]} {
    %c0 = arith.constant 0 : index
    %c0_0 = arith.constant 0 : index
    %0 = vector.load %arg1[%c0, %c0_0] : memref<256x128xf32, #tpu.memory_space<vmem>>, vector<256x128xf32>
    %1 = arith.truncf %0 : vector<256x128xf32> to vector<256x128xbf16>
    %c0_1 = arith.constant 0 : index
    %c0_2 = arith.constant 0 : index
    %2 = vector.load %arg2[%c0_1, %c0_2] : memref<432x128xbf16, #tpu.memory_space<vmem>>, vector<128x128xbf16>
    %c128 = arith.constant 128 : index
    %c0_3 = arith.constant 0 : index
    %3 = vector.load %arg2[%c128, %c0_3] : memref<432x128xbf16, #tpu.memory_space<vmem>>, vector<128x128xbf16>
    %c256 = arith.constant 256 : index
    %c0_4 = arith.constant 0 : index
    %4 = vector.load %arg2[%c256, %c0_4] : memref<432x128xbf16, #tpu.memory_space<vmem>>, vector<128x128xbf16>
    %c384 = arith.constant 384 : index
    %c0_5 = arith.constant 0 : index
    %5 = vector.load %arg2[%c384, %c0_5] : memref<432x128xbf16, #tpu.memory_space<vmem>>, vector<1x128xbf16>
    %6 = arith.extf %5 : vector<1x128xbf16> to vector<1x128xf32>
    %c400 = arith.constant 400 : index
    %c0_6 = arith.constant 0 : index
    %7 = vector.load %arg2[%c400, %c0_6] : memref<432x128xbf16, #tpu.memory_space<vmem>>, vector<1x128xbf16>
    %8 = arith.extf %7 : vector<1x128xbf16> to vector<1x128xf32>
    %c416 = arith.constant 416 : index
    %c0_7 = arith.constant 0 : index
    %9 = vector.load %arg2[%c416, %c0_7] : memref<432x128xbf16, #tpu.memory_space<vmem>>, vector<1x128xbf16>
    %10 = arith.extf %9 : vector<1x128xbf16> to vector<1x128xf32>
    %cst = arith.constant dense<0.000000e+00> : vector<256x128xf32>
    %11 = tpu.matmul %1, %2, %cst {dimension_numbers = #tpu.dot_dimension_numbers<[1], [0], [0], [1], [0, 0, 1, 1], [], []>} : vector<256x128xbf16>, vector<128x128xbf16>, vector<256x128xf32> -> vector<256x128xf32>
    %12 = vector.broadcast %6 : vector<1x128xf32> to vector<256x128xf32>
    %13 = arith.addf %11, %12 : vector<256x128xf32>
    %cst_8 = arith.constant 0.000000e+00 : f32
    %14 = vector.broadcast %cst_8 : f32 to vector<256x128xf32>
    %15 = arith.maximumf %13, %14 : vector<256x128xf32>
    %16 = arith.truncf %15 : vector<256x128xf32> to vector<256x128xbf16>
    %cst_9 = arith.constant dense<0.000000e+00> : vector<256x128xf32>
    %17 = tpu.matmul %16, %3, %cst_9 {dimension_numbers = #tpu.dot_dimension_numbers<[1], [0], [0], [1], [0, 0, 1, 1], [], []>} : vector<256x128xbf16>, vector<128x128xbf16>, vector<256x128xf32> -> vector<256x128xf32>
    %18 = vector.broadcast %8 : vector<1x128xf32> to vector<256x128xf32>
    %19 = arith.addf %17, %18 : vector<256x128xf32>
    %cst_10 = arith.constant 0.000000e+00 : f32
    %20 = vector.broadcast %cst_10 : f32 to vector<256x128xf32>
    %21 = arith.maximumf %19, %20 : vector<256x128xf32>
    %22 = arith.truncf %21 : vector<256x128xf32> to vector<256x128xbf16>
    %cst_11 = arith.constant dense<0.000000e+00> : vector<256x128xf32>
    %23 = tpu.matmul %22, %4, %cst_11 {dimension_numbers = #tpu.dot_dimension_numbers<[1], [0], [0], [1], [0, 0, 1, 1], [], []>} : vector<256x128xbf16>, vector<128x128xbf16>, vector<256x128xf32> -> vector<256x128xf32>
    %24 = vector.broadcast %10 : vector<1x128xf32> to vector<256x128xf32>
    %25 = arith.addf %23, %24 : vector<256x128xf32>
    %cst_12 = arith.constant dense<0xFF800000> : vector<256xf32>
    %26 = vector.multi_reduction <maximumf>, %25, %cst_12 [1] : vector<256x128xf32> to vector<256xf32>
    %27 = vector.shape_cast %26 : vector<256xf32> to vector<256x1xf32>
    %28 = vector.broadcast %27 : vector<256x1xf32> to vector<256x128xf32>
    %29 = arith.subf %25, %28 : vector<256x128xf32>
    %30 = math.exp %29 : vector<256x128xf32>
    %cst_13 = arith.constant dense<0.000000e+00> : vector<256xf32>
    %31 = vector.multi_reduction <add>, %30, %cst_13 [1] : vector<256x128xf32> to vector<256xf32>
    %32 = vector.shape_cast %31 : vector<256xf32> to vector<256x1xf32>
    %33 = tpu.reciprocal %32 : vector<256x1xf32> -> vector<256x1xf32>
    %34 = vector.broadcast %33 : vector<256x1xf32> to vector<256x128xf32>
    %35 = arith.mulf %30, %34 : vector<256x128xf32>
    %c0_14 = arith.constant 0 : index
    %c0_15 = arith.constant 0 : index
    %36 = vector.load %arg3[%c0_14, %c0_15] : memref<256x128xf32, #tpu.memory_space<vmem>>, vector<256x128xf32>
    tpu.vector_store %arg3[%c0_14, %c0_15], %35 {strides = array<i32>} : memref<256x128xf32, #tpu.memory_space<vmem>>, vector<256x128xf32>,
    return
  }
  func.func @transform_0(%arg0: i32) -> (i32, i32) {
    %c0_i32 = arith.constant 0 : i32
    %c0_i32_0 = arith.constant 0 : i32
    return %arg0, %c0_i32 : i32, i32
  }
  func.func @transform_1(%arg0: i32) -> (i32, i32) {
    %c0_i32 = arith.constant 0 : i32
    %c0_i32_0 = arith.constant 0 : i32
    %c0_i32_1 = arith.constant 0 : i32
    return %c0_i32, %c0_i32_0 : i32, i32
  }
  func.func @transform_2(%arg0: i32) -> (i32, i32) {
    %c0_i32 = arith.constant 0 : i32
    %c0_i32_0 = arith.constant 0 : i32
    return %arg0, %c0_i32 : i32, i32
  }
}

</mosaic_0001>

<llo_original>
// kernel: policy_forward.1
$region0: #{policy_forward.1}
  #allocation0 [shape = 'u32[]', space=smem, size = 0x4, offset = 0x4, fixed_abs, tag = 'smem constant byte address 0x4 - core index']
  #allocation1 [shape = 'u32[72,128]{1,0:T(1,128)}', space=vmem, size = 0x9000, scoped, tag = 'internal scratch']
  %s0 = inlined_call_operand.vmem [shape: f32[512,128], index: 0, kind: input, shape index: {}]
  %s1 = inlined_call_operand.vmem [shape: bf16[432,128], index: 1, kind: input, shape index: {}]
  %s2 = inlined_call_operand.vmem [shape: f32[512,128], index: 2, kind: output, shape index: {}]
  %s3 = sld [smem:[#allocation0]]
  $region41: #{policy_forward.1} parent=0
    _
  %s5 = ssub.s32 1, %s3
  %s6 = scalar_select 0, %s5, %s3
  loop: start=0, step=1, limit=4
  $region2: #{policy_forward.1} parent=0 // loop_pre_header
    _
  $region3: #{policy_forward.1} parent=0 // loop_header
    %s8 = sphi 0, %s12
    %p9 = scmp.ge.s32.totalorder %s8, 4
    %s18 = sphi 0, %s20
    %s21 = sphi 0, %s18
    %s22 = sphi 0, %s21
    %s38 = sphi 0, %s22
    %s42 = sphi 0, %s42
    %s44 = sphi 0, %s42
    %s45 = sphi 0, %s44
    %s59 = sphi 0, %s45
    %s65 = sphi 0, %s67
    %s68 = sphi 0, %s65
    %s69 = sphi 0, %s68
    %s85 = sphi 0, %s69
  $region4: #{policy_forward.1} parent=0 // loop_header_branch
    %11 = sbr.rel (%p9) target = $region8
  $region5: #{policy_forward.1} parent=0 // loop_body
    %s13 = ssub.s32 %s8, 1
    %s14 = ssub.s32 %s8, 2
    %s15 = sadd.s32 %s8, 1
    %s16 = ssub.s32 %s8, %s15
    %p17 = scmp.eq.s32.totalorder %s16, 0
    %s19 = sadd.s32 %s18, 1
    %s20 = scalar_select %p17, %s18, %s19
    %p23 = pneg %p17
    %p24 = scmp.eq.s32.totalorder %s8, 1
    %p25 = por %p23, %p24
    %p26 = scmp.ne.s32.totalorder %s18, %s21
    %p27 = scmp.eq.s32.totalorder %s8, 0
    %p28 = por %p26, %p27
    %p29 = scmp.ne.s32.totalorder %s18, %s21
    %p30 = scmp.eq.s32.totalorder %s13, 1
    %p31 = por %p29, %p30
    %p32 = scmp.ne.s32.totalorder %s21, %s22
    %p33 = scmp.eq.s32.totalorder %s13, 0
    %p34 = por %p32, %p33
    %p35 = scmp.ne.s32.totalorder %s21, %s22
    %p36 = scmp.eq.s32.totalorder %s14, 1
    %p37 = por %p35, %p36
    %p39 = scmp.ne.s32.totalorder %s22, %s38
    %p40 = scmp.eq.s32.totalorder %s14, 0
    %p41 = por %p39, %p40
    %s43 = sadd.s32 %s42, 1
    %p46 = scmp.eq.s32.totalorder %s8, 1
    %p47 = scmp.ne.s32.totalorder %s42, %s44
    %p48 = scmp.eq.s32.totalorder %s8, 0
    %p49 = por %p47, %p48
    %p50 = scmp.ne.s32.totalorder %s42, %s44
    %p51 = scmp.eq.s32.totalorder %s13, 1
    %p52 = por %p50, %p51
    %p53 = scmp.ne.s32.totalorder %s44, %s45
    %p54 = scmp.eq.s32.totalorder %s13, 0
    %p55 = por %p53, %p54
    %p56 = scmp.ne.s32.totalorder %s44, %s45
    %p57 = scmp.eq.s32.totalorder %s14, 1
    %p58 = por %p56, %p57
    %p60 = scmp.ne.s32.totalorder %s45, %s59
    %p61 = scmp.eq.s32.totalorder %s14, 0
    %p62 = por %p60, %p61
    %s63 = ssub.s32 %s8, %s15
    %p64 = scmp.eq.s32.totalorder %s63, 0
    %s66 = sadd.s32 %s65, 1
    %s67 = scalar_select %p64, %s65, %s66
    %p70 = pneg %p64
    %p71 = scmp.eq.s32.totalorder %s8, 1
    %p72 = por %p70, %p71
    %p73 = scmp.ne.s32.totalorder %s65, %s68
    %p74 = scmp.eq.s32.totalorder %s8, 0
    %p75 = por %p73, %p74
    %p76 = scmp.ne.s32.totalorder %s65, %s68
    %p77 = scmp.eq.s32.totalorder %s13, 1
    %p78 = por %p76, %p77
    %p79 = scmp.ne.s32.totalorder %s68, %s69
    %p80 = scmp.eq.s32.totalorder %s13, 0
    %p81 = por %p79, %p80
    %p82 = scmp.ne.s32.totalorder %s68, %s69
    %p83 = scmp.eq.s32.totalorder %s14, 1
    %p84 = por %p82, %p83
    %p86 = scmp.ne.s32.totalorder %s69, %s85
    %p87 = scmp.eq.s32.totalorder %s14, 0
    %p88 = por %p86, %p87
    %p89 = scmp.le.s32.totalorder 1, %s8
    %p90 = scmp.lt.s32.totalorder %s8, 3
    %p91 = pnand %p89, %p90
    %p92 = pneg %p91
    // Predicated region
    $region9: #{policy_forward.1} parent=5 // pred_check
      _
    $region10: #{policy_forward.1} parent=5 // pred_check_branch
      %94 = sbr.rel (%p91) target = $region12
    $region11: #{policy_forward.1} parent=5 // pred_region
      %s95 = ssub.s32 %s8, 1
      // Predicated region
      $region13: #{policy_forward.1} parent=11 // pred_check
        %p96 = pneg %p55
      $region14: #{policy_forward.1} parent=11 // pred_check_branch
        %98 = sbr.rel (%p96) target = $region16
      $region15: #{policy_forward.1} parent=11 // pred_region
        _
      $region16: #{policy_forward.1} parent=11 // pred_fallthru
        _
    $region12: #{policy_forward.1} parent=5 // pred_fallthru
      _
    %p99 = scmp.lt.s32.totalorder %s8, 2
    // Predicated region
    $region17: #{policy_forward.1} parent=5 // pred_check
      %p100 = pneg %p99
    $region18: #{policy_forward.1} parent=5 // pred_check_branch
      %102 = sbr.rel (%p100) target = $region20
    $region19: #{policy_forward.1} parent=5 // pred_region
      // Predicated region
      $region21: #{policy_forward.1} parent=19 // pred_check
        %p103 = pneg %p28
      $region22: #{policy_forward.1} parent=19 // pred_check_branch
        %105 = sbr.rel (%p103) target = $region24
      $region23: #{policy_forward.1} parent=19 // pred_region
        %s106 = smul.u32 32, %s8
        %p107 = scmp.lt.s32.totalorder %s106, 63
        %s108 = scalar_select %p107, %s106, 63
        %s109 = smul.addr %s108, 8
        %s110 = scalar_lea.vmem %s0, %s109
        %s111 = smul.u32 32, %s8
      $region24: #{policy_forward.1} parent=19 // pred_fallthru
        _
    $region20: #{policy_forward.1} parent=5 // pred_fallthru
      _
    %p112 = scmp.le.s32.totalorder 1, %s8
    %p113 = scmp.lt.s32.totalorder %s8, 3
    %p114 = pnand %p112, %p113
    %p115 = pneg %p114
    // Predicated region
    $region25: #{policy_forward.1} parent=5 // pred_check
      _
    $region26: #{policy_forward.1} parent=5 // pred_check_branch
      %117 = sbr.rel (%p114) target = $region28
    $region27: #{policy_forward.1} parent=5 // pred_region
      %s118 = ssub.s32 %s8, 1
      %s119 = smul.u32 32, %s13
      %p120 = scmp.lt.s32.totalorder %s119, 63
      %s121 = scalar_select %p120, %s119, 63
      %s122 = smul.addr %s121, 8
      %s123 = scalar_lea.vmem %s0, %s122
      %p124 = pneg %p34
      %p125 = pneg %p31
      %p126 = pneg %p55
      %p127 = pneg %p52
      %p128 = pneg %p81
      %p129 = pneg %p78
      %s130 = smul.u32 32, %s13
      %p131 = scmp.lt.s32.totalorder %s130, 63
      %s132 = scalar_select %p131, %s130, 63
      %s133 = smul.addr %s132, 8
      %s134 = scalar_lea.vmem %s2, %s133
      %s135 = smul.u32 32, %s13
      %p136 = scmp.lt.s32.totalorder %s135, 63
      %s137 = scalar_select %p136, %s135, 63
      %s138 = smul.addr %s137, 8
      %s139 = scalar_lea.vmem %s0, %s138
      %s140 = smul.u32 32, %s13
      %s141 = smul.u32 32, %s13
      %p142 = scmp.lt.s32.totalorder %s141, 63
      %s143 = scalar_select %p142, %s141, 63
      %s144 = smul.addr %s143, 8
      %s145 = scalar_lea.vmem %s2, %s144
      %s146 = smul.u32 32, %s13
      %v147 = vld [vmem:[%s139] sm:$0xff]
      %v148 = vld [vmem:[%s139 + $0x8] sm:$0xff]
      %v149 = vld [vmem:[%s139 + $0x10] sm:$0xff]
      %v150 = vld [vmem:[%s139 + $0x18] sm:$0xff]
      %v151 = vld [vmem:[%s139 + $0x20] sm:$0xff]
      %v152 = vld [vmem:[%s139 + $0x28] sm:$0xff]
      %v153 = vld [vmem:[%s139 + $0x30] sm:$0xff]
      %v154 = vld [vmem:[%s139 + $0x38] sm:$0xff]
      %v155 = vld [vmem:[%s139 + $0x40] sm:$0xff]
      %v156 = vld [vmem:[%s139 + $0x48] sm:$0xff]
      %v157 = vld [vmem:[%s139 + $0x50] sm:$0xff]
      %v158 = vld [vmem:[%s139 + $0x58] sm:$0xff]
      %v159 = vld [vmem:[%s139 + $0x60] sm:$0xff]
      %v160 = vld [vmem:[%s139 + $0x68] sm:$0xff]
      %v161 = vld [vmem:[%s139 + $0x70] sm:$0xff]
      %v162 = vld [vmem:[%s139 + $0x78] sm:$0xff]
      %v163 = vld [vmem:[%s139 + $0x80] sm:$0xff]
      %v164 = vld [vmem:[%s139 + $0x88] sm:$0xff]
      %v165 = vld [vmem:[%s139 + $0x90] sm:$0xff]
      %v166 = vld [vmem:[%s139 + $0x98] sm:$0xff]
      %v167 = vld [vmem:[%s139 + $0xa0] sm:$0xff]
      %v168 = vld [vmem:[%s139 + $0xa8] sm:$0xff]
      %v169 = vld [vmem:[%s139 + $0xb0] sm:$0xff]
      %v170 = vld [vmem:[%s139 + $0xb8] sm:$0xff]
      %v171 = vld [vmem:[%s139 + $0xc0] sm:$0xff]
      %v172 = vld [vmem:[%s139 + $0xc8] sm:$0xff]
      %v173 = vld [vmem:[%s139 + $0xd0] sm:$0xff]
      %v174 = vld [vmem:[%s139 + $0xd8] sm:$0xff]
      %v175 = vld [vmem:[%s139 + $0xe0] sm:$0xff]
      %v176 = vld [vmem:[%s139 + $0xe8] sm:$0xff]
      %v177 = vld [vmem:[%s139 + $0xf0] sm:$0xff]
      %v178 = vld [vmem:[%s139 + $0xf8] sm:$0xff]
      %v179 = vpack.c.bf16 %v148, %v147
      %v180 = vpack.c.bf16 %v150, %v149
      %v181 = vpack.c.bf16 %v152, %v151
      %v182 = vpack.c.bf16 %v154, %v153
      %v183 = vpack.c.bf16 %v156, %v155
      %v184 = vpack.c.bf16 %v158, %v157
      %v185 = vpack.c.bf16 %v160, %v159
      %v186 = vpack.c.bf16 %v162, %v161
      %v187 = vpack.c.bf16 %v164, %v163
      %v188 = vpack.c.bf16 %v166, %v165
      %v189 = vpack.c.bf16 %v168, %v167
      %v190 = vpack.c.bf16 %v170, %v169
      %v191 = vpack.c.bf16 %v172, %v171
      %v192 = vpack.c.bf16 %v174, %v173
      %v193 = vpack.c.bf16 %v176, %v175
      %v194 = vpack.c.bf16 %v178, %v177
      %v195 = vld [vmem:[%s1] sm:$0xf]
      %v196 = vld [vmem:[%s1 + $0x4] sm:$0xf]
      %v197 = vld [vmem:[%s1 + $0x8] sm:$0xf]
      %v198 = vld [vmem:[%s1 + $0xc] sm:$0xf]
      %v199 = vld [vmem:[%s1 + $0x10] sm:$0xf]
      %v200 = vld [vmem:[%s1 + $0x14] sm:$0xf]
      %v201 = vld [vmem:[%s1 + $0x18] sm:$0xf]
      %v202 = vld [vmem:[%s1 + $0x1c] sm:$0xf]
      %v203 = vld [vmem:[%s1 + $0x20] sm:$0xf]
      %v204 = vld [vmem:[%s1 + $0x24] sm:$0xf]
      %v205 = vld [vmem:[%s1 + $0x28] sm:$0xf]
      %v206 = vld [vmem:[%s1 + $0x2c] sm:$0xf]
      %v207 = vld [vmem:[%s1 + $0x30] sm:$0xf]
      %v208 = vld [vmem:[%s1 + $0x34] sm:$0xf]
      %v209 = vld [vmem:[%s1 + $0x38] sm:$0xf]
      %v210 = vld [vmem:[%s1 + $0x3c] sm:$0xf]
      %v211 = vld [vmem:[%s1 + $0x40] sm:$0xf]
      %v212 = vld [vmem:[%s1 + $0x44] sm:$0xf]
      %v213 = vld [vmem:[%s1 + $0x48] sm:$0xf]
      %v214 = vld [vmem:[%s1 + $0x4c] sm:$0xf]
      %v215 = vld [vmem:[%s1 + $0x50] sm:$0xf]
      %v216 = vld [vmem:[%s1 + $0x54] sm:$0xf]
      %v217 = vld [vmem:[%s1 + $0x58] sm:$0xf]
      %v218 = vld [vmem:[%s1 + $0x5c] sm:$0xf]
      %v219 = vld [vmem:[%s1 + $0x60] sm:$0xf]
      %v220 = vld [vmem:[%s1 + $0x64] sm:$0xf]
      %v221 = vld [vmem:[%s1 + $0x68] sm:$0xf]
      %v222 = vld [vmem:[%s1 + $0x6c] sm:$0xf]
      %v223 = vld [vmem:[%s1 + $0x70] sm:$0xf]
      %v224 = vld [vmem:[%s1 + $0x74] sm:$0xf]
      %v225 = vld [vmem:[%s1 + $0x78] sm:$0xf]
      %v226 = vld [vmem:[%s1 + $0x7c] sm:$0xf]
      %v227 = vld [vmem:[%s1 + $0x80] sm:$0xf]
      %v228 = vld [vmem:[%s1 + $0x84] sm:$0xf]
      %v229 = vld [vmem:[%s1 + $0x88] sm:$0xf]
      %v230 = vld [vmem:[%s1 + $0x8c] sm:$0xf]
      %v231 = vld [vmem:[%s1 + $0x90] sm:$0xf]
      %v232 = vld [vmem:[%s1 + $0x94] sm:$0xf]
      %v233 = vld [vmem:[%s1 + $0x98] sm:$0xf]
      %v234 = vld [vmem:[%s1 + $0x9c] sm:$0xf]
      %v235 = vld [vmem:[%s1 + $0xa0] sm:$0xf]
      %v236 = vld [vmem:[%s1 + $0xa4] sm:$0xf]
      %v237 = vld [vmem:[%s1 + $0xa8] sm:$0xf]
      %v238 = vld [vmem:[%s1 + $0xac] sm:$0xf]
      %v239 = vld [vmem:[%s1 + $0xb0] sm:$0xf]
      %v240 = vld [vmem:[%s1 + $0xb4] sm:$0xf]
      %v241 = vld [vmem:[%s1 + $0xb8] sm:$0xf]
      %v242 = vld [vmem:[%s1 + $0xbc] sm:$0xf]
      %v243 = vld [vmem:[%s1 + $0xc0] sm:$0x1]
      %v244 = vunpack.c.l.bf16 %v243
      %v245 = vld [vmem:[%s1 + $0xc8] sm:$0x1]
      %v246 = vunpack.c.l.bf16 %v245
      %v247 = vld [vmem:[%s1 + $0xd0] sm:$0x1]
      %v248 = vunpack.c.l.bf16 %v247
      %v249 = vperm.slane %v244, 0
      %v266 = vunpack.c.l.b16 %v195
      %v267 = vunpack.c.l.b16 %v196
      %v268 = vunpack.c.l.b16 %v197
      %v269 = vunpack.c.l.b16 %v198
      %v270 = vunpack.c.l.b16 %v199
      %v271 = vunpack.c.l.b16 %v200
      %v272 = vunpack.c.l.b16 %v201
      %v273 = vunpack.c.l.b16 %v202
      %v274 = vunpack.c.l.b16 %v203
      %v275 = vunpack.c.l.b16 %v204
      %v276 = vunpack.c.l.b16 %v205
      %v277 = vunpack.c.l.b16 %v206
      %v278 = vunpack.c.l.b16 %v207
      %v279 = vunpack.c.l.b16 %v208
      %v280 = vunpack.c.l.b16 %v209
      %v281 = vunpack.c.l.b16 %v210
      %v282 = vpack.c.b16 %v267, %v266
      %v283 = vpack.c.b16 %v269, %v268
      %v284 = vpack.c.b16 %v271, %v270
      %v285 = vpack.c.b16 %v273, %v272
      %v286 = vpack.c.b16 %v275, %v274
      %v287 = vpack.c.b16 %v277, %v276
      %v288 = vpack.c.b16 %v279, %v278
      %v289 = vpack.c.b16 %v281, %v280
      %298 = vmatpush.bf16.msra.mxu0 %v289
      %299 = vmatpush.bf16.msra.mxu0 %v288
      %300 = vmatpush.bf16.msra.mxu0 %v287
      %301 = vmatpush.bf16.msra.mxu0 %v286
      %302 = vmatpush.bf16.msra.mxu0 %v285
      %303 = vmatpush.bf16.msra.mxu0 %v284
      %304 = vmatpush.bf16.msra.mxu0 %v283
      %305 = vmatpush.bf16.msra.mxu0 %v282
      %306 = vmatmul.bf16.gmra.mxu0 %v179
      %v307 = vpop.f32.mrf.mxu0
      %v308 = vadd.f32 %v249, %v307
      %v309 = vpop.f32.mrf.mxu0
      %v310 = vadd.f32 %v249, %v309
      %311 = vmatmul.bf16.gmra.mxu0 %v180
      %v312 = vpop.f32.mrf.mxu0
      %v313 = vadd.f32 %v249, %v312
      %v314 = vpop.f32.mrf.mxu0
      %v315 = vadd.f32 %v249, %v314
      %316 = vmatmul.bf16.gmra.mxu0 %v181
      %v317 = vpop.f32.mrf.mxu0
      %v318 = vadd.f32 %v249, %v317
      %v319 = vpop.f32.mrf.mxu0
      %v320 = vadd.f32 %v249, %v319
      %321 = vmatmul.bf16.gmra.mxu0 %v182
      %v322 = vpop.f32.mrf.mxu0
      %v323 = vadd.f32 %v249, %v322
      %v324 = vpop.f32.mrf.mxu0
      %v325 = vadd.f32 %v249, %v324
      %326 = vmatmul.bf16.gmra.mxu0 %v183
      %v327 = vpop.f32.mrf.mxu0
      %v328 = vadd.f32 %v249, %v327
      %v329 = vpop.f32.mrf.mxu0
      %v330 = vadd.f32 %v249, %v329
      %331 = vmatmul.bf16.gmra.mxu0 %v184
      %v332 = vpop.f32.mrf.mxu0
      %v333 = vadd.f32 %v249, %v332
      %v334 = vpop.f32.mrf.mxu0
      %v335 = vadd.f32 %v249, %v334
      %336 = vmatmul.bf16.gmra.mxu0 %v185
      %v337 = vpop.f32.mrf.mxu0
      %v338 = vadd.f32 %v249, %v337
      %v339 = vpop.f32.mrf.mxu0
      %v340 = vadd.f32 %v249, %v339
      %341 = vmatmul.bf16.gmra.mxu0 %v186
      %v342 = vpop.f32.mrf.mxu0
      %v343 = vadd.f32 %v249, %v342
      %v344 = vpop.f32.mrf.mxu0
      %v345 = vadd.f32 %v249, %v344
      %346 = vmatmul.bf16.gmra.mxu0 %v187
      %v347 = vpop.f32.mrf.mxu0
      %v348 = vadd.f32 %v249, %v347
      %v349 = vpop.f32.mrf.mxu0
      %v350 = vadd.f32 %v249, %v349
      %351 = vmatmul.bf16.gmra.mxu0 %v188
      %v352 = vpop.f32.mrf.mxu0
      %v353 = vadd.f32 %v249, %v352
      %v354 = vpop.f32.mrf.mxu0
      %v355 = vadd.f32 %v249, %v354
      %356 = vmatmul.bf16.gmra.mxu0 %v189
      %v357 = vpop.f32.mrf.mxu0
      %v358 = vadd.f32 %v249, %v357
      %v359 = vpop.f32.mrf.mxu0
      %v360 = vadd.f32 %v249, %v359
      %361 = vmatmul.bf16.gmra.mxu0 %v190
      %v362 = vpop.f32.mrf.mxu0
      %v363 = vadd.f32 %v249, %v362
      %v364 = vpop.f32.mrf.mxu0
      %v365 = vadd.f32 %v249, %v364
      %366 = vmatmul.bf16.gmra.mxu0 %v191
      %v367 = vpop.f32.mrf.mxu0
      %v368 = vadd.f32 %v249, %v367
      %v369 = vpop.f32.mrf.mxu0
      %v370 = vadd.f32 %v249, %v369
      %371 = vmatmul.bf16.gmra.mxu0 %v192
      %v372 = vpop.f32.mrf.mxu0
      %v373 = vadd.f32 %v249, %v372
      %v374 = vpop.f32.mrf.mxu0
      %v375 = vadd.f32 %v249, %v374
      %376 = vmatmul.bf16.gmra.mxu0 %v193
      %v377 = vpop.f32.mrf.mxu0
      %v378 = vadd.f32 %v249, %v377
      %v379 = vpop.f32.mrf.mxu0
      %v380 = vadd.f32 %v249, %v379
      %381 = vmatmul.bf16.gmra.mxu0 %v194
      %v382 = vpop.f32.mrf.mxu0
      %v383 = vadd.f32 %v249, %v382
      %v384 = vpop.f32.mrf.mxu0
      %v385 = vadd.f32 %v249, %v384
      %386 = vdwg.mxu0
      %v387 = vmax.f32 %v308, 0.0
      %v388 = vmax.f32 %v310, 0.0
      %v389 = vmax.f32 %v313, 0.0
      %v390 = vmax.f32 %v315, 0.0
      %v391 = vmax.f32 %v318, 0.0
      %v392 = vmax.f32 %v320, 0.0
      %v393 = vmax.f32 %v323, 0.0
      %v394 = vmax.f32 %v325, 0.0
      %v395 = vmax.f32 %v328, 0.0
      %v396 = vmax.f32 %v330, 0.0
      %v397 = vmax.f32 %v333, 0.0
      %v398 = vmax.f32 %v335, 0.0
      %v399 = vmax.f32 %v338, 0.0
      %v400 = vmax.f32 %v340, 0.0
      %v401 = vmax.f32 %v343, 0.0
      %v402 = vmax.f32 %v345, 0.0
      %v403 = vmax.f32 %v348, 0.0
      %v404 = vmax.f32 %v350, 0.0
      %v405 = vmax.f32 %v353, 0.0
      %v406 = vmax.f32 %v355, 0.0
      %v407 = vmax.f32 %v358, 0.0
      %v408 = vmax.f32 %v360, 0.0
      %v409 = vmax.f32 %v363, 0.0
      %v410 = vmax.f32 %v365, 0.0
      %v411 = vmax.f32 %v368, 0.0
      %v412 = vmax.f32 %v370, 0.0
      %v413 = vmax.f32 %v373, 0.0
      %v414 = vmax.f32 %v375, 0.0
      %v415 = vmax.f32 %v378, 0.0
      %v416 = vmax.f32 %v380, 0.0
      %v417 = vmax.f32 %v383, 0.0
      %v418 = vmax.f32 %v385, 0.0
      %v419 = vpack.c.bf16 %v388, %v387
      %v420 = vpack.c.bf16 %v390, %v389
      %v421 = vpack.c.bf16 %v392, %v391
      %v422 = vpack.c.bf16 %v394, %v393
      %v423 = vpack.c.bf16 %v396, %v395
      %v424 = vpack.c.bf16 %v398, %v397
      %v425 = vpack.c.bf16 %v400, %v399
      %v426 = vpack.c.bf16 %v402, %v401
      %v427 = vpack.c.bf16 %v404, %v403
      %v428 = vpack.c.bf16 %v406, %v405
      %v429 = vpack.c.bf16 %v408, %v407
      %v430 = vpack.c.bf16 %v410, %v409
      %v431 = vpack.c.bf16 %v412, %v411
      %v432 = vpack.c.bf16 %v414, %v413
      %v433 = vpack.c.bf16 %v416, %v415
      %v434 = vpack.c.bf16 %v418, %v417
      %v435 = vperm.slane %v246, 0
      %v452 = vunpack.c.l.b16 %v211
      %v453 = vunpack.c.l.b16 %v212
      %v454 = vunpack.c.l.b16 %v213
      %v455 = vunpack.c.l.b16 %v214
      %v456 = vunpack.c.l.b16 %v215
      %v457 = vunpack.c.l.b16 %v216
      %v458 = vunpack.c.l.b16 %v217
      %v459 = vunpack.c.l.b16 %v218
      %v460 = vunpack.c.l.b16 %v219
      %v461 = vunpack.c.l.b16 %v220
      %v462 = vunpack.c.l.b16 %v221
      %v463 = vunpack.c.l.b16 %v222
      %v464 = vunpack.c.l.b16 %v223
      %v465 = vunpack.c.l.b16 %v224
      %v466 = vunpack.c.l.b16 %v225
      %v467 = vunpack.c.l.b16 %v226
      %v468 = vpack.c.b16 %v453, %v452
      %v469 = vpack.c.b16 %v455, %v454
      %v470 = vpack.c.b16 %v457, %v456
      %v471 = vpack.c.b16 %v459, %v458
      %v472 = vpack.c.b16 %v461, %v460
      %v473 = vpack.c.b16 %v463, %v462
      %v474 = vpack.c.b16 %v465, %v464
      %v475 = vpack.c.b16 %v467, %v466
      %484 = vmatpush.bf16.msra.mxu0 %v475
      %485 = vmatpush.bf16.msra.mxu0 %v474
      %486 = vmatpush.bf16.msra.mxu0 %v473
      %487 = vmatpush.bf16.msra.mxu0 %v472
      %488 = vmatpush.bf16.msra.mxu0 %v471
      %489 = vmatpush.bf16.msra.mxu0 %v470
      %490 = vmatpush.bf16.msra.mxu0 %v469
      %491 = vmatpush.bf16.msra.mxu0 %v468
      %492 = vmatmul.bf16.gmra.mxu0 %v419
      %v493 = vpop.f32.mrf.mxu0
      %v494 = vadd.f32 %v435, %v493
      %v495 = vpop.f32.mrf.mxu0
      %v496 = vadd.f32 %v435, %v495
      %497 = vmatmul.bf16.gmra.mxu0 %v420
      %v498 = vpop.f32.mrf.mxu0
      %v499 = vadd.f32 %v435, %v498
      %v500 = vpop.f32.mrf.mxu0
      %v501 = vadd.f32 %v435, %v500
      %502 = vmatmul.bf16.gmra.mxu0 %v421
      %v503 = vpop.f32.mrf.mxu0
      %v504 = vadd.f32 %v435, %v503
      %v505 = vpop.f32.mrf.mxu0
      %v506 = vadd.f32 %v435, %v505
      %507 = vmatmul.bf16.gmra.mxu0 %v422
      %v508 = vpop.f32.mrf.mxu0
      %v509 = vadd.f32 %v435, %v508
      %v510 = vpop.f32.mrf.mxu0
      %v511 = vadd.f32 %v435, %v510
      %512 = vmatmul.bf16.gmra.mxu0 %v423
      %v513 = vpop.f32.mrf.mxu0
      %v514 = vadd.f32 %v435, %v513
      %v515 = vpop.f32.mrf.mxu0
      %v516 = vadd.f32 %v435, %v515
      %517 = vmatmul.bf16.gmra.mxu0 %v424
      %v518 = vpop.f32.mrf.mxu0
      %v519 = vadd.f32 %v435, %v518
      %v520 = vpop.f32.mrf.mxu0
      %v521 = vadd.f32 %v435, %v520
      %522 = vmatmul.bf16.gmra.mxu0 %v425
      %v523 = vpop.f32.mrf.mxu0
      %v524 = vadd.f32 %v435, %v523
      %v525 = vpop.f32.mrf.mxu0
      %v526 = vadd.f32 %v435, %v525
      %527 = vmatmul.bf16.gmra.mxu0 %v426
      %v528 = vpop.f32.mrf.mxu0
      %v529 = vadd.f32 %v435, %v528
      %v530 = vpop.f32.mrf.mxu0
      %v531 = vadd.f32 %v435, %v530
      %532 = vmatmul.bf16.gmra.mxu0 %v427
      %v533 = vpop.f32.mrf.mxu0
      %v534 = vadd.f32 %v435, %v533
      %v535 = vpop.f32.mrf.mxu0
      %v536 = vadd.f32 %v435, %v535
      %537 = vmatmul.bf16.gmra.mxu0 %v428
      %v538 = vpop.f32.mrf.mxu0
      %v539 = vadd.f32 %v435, %v538
      %v540 = vpop.f32.mrf.mxu0
      %v541 = vadd.f32 %v435, %v540
      %542 = vmatmul.bf16.gmra.mxu0 %v429
      %v543 = vpop.f32.mrf.mxu0
      %v544 = vadd.f32 %v435, %v543
      %v545 = vpop.f32.mrf.mxu0
      %v546 = vadd.f32 %v435, %v545
      %547 = vmatmul.bf16.gmra.mxu0 %v430
      %v548 = vpop.f32.mrf.mxu0
      %v549 = vadd.f32 %v435, %v548
      %v550 = vpop.f32.mrf.mxu0
      %v551 = vadd.f32 %v435, %v550
      %552 = vmatmul.bf16.gmra.mxu0 %v431
      %v553 = vpop.f32.mrf.mxu0
      %v554 = vadd.f32 %v435, %v553
      %v555 = vpop.f32.mrf.mxu0
      %v556 = vadd.f32 %v435, %v555
      %557 = vmatmul.bf16.gmra.mxu0 %v432
      %v558 = vpop.f32.mrf.mxu0
      %v559 = vadd.f32 %v435, %v558
      %v560 = vpop.f32.mrf.mxu0
      %v561 = vadd.f32 %v435, %v560
      %562 = vmatmul.bf16.gmra.mxu0 %v433
      %v563 = vpop.f32.mrf.mxu0
      %v564 = vadd.f32 %v435, %v563
      %v565 = vpop.f32.mrf.mxu0
      %v566 = vadd.f32 %v435, %v565
      %567 = vmatmul.bf16.gmra.mxu0 %v434
      %v568 = vpop.f32.mrf.mxu0
      %v569 = vadd.f32 %v435, %v568
      %v570 = vpop.f32.mrf.mxu0
      %v571 = vadd.f32 %v435, %v570
      %572 = vdwg.mxu0
      %v573 = vmax.f32 %v494, 0.0
      %v574 = vmax.f32 %v496, 0.0
      %v575 = vmax.f32 %v499, 0.0
      %v576 = vmax.f32 %v501, 0.0
      %v577 = vmax.f32 %v504, 0.0
      %v578 = vmax.f32 %v506, 0.0
      %v579 = vmax.f32 %v509, 0.0
      %v580 = vmax.f32 %v511, 0.0
      %v581 = vmax.f32 %v514, 0.0
      %v582 = vmax.f32 %v516, 0.0
      %v583 = vmax.f32 %v519, 0.0
      %v584 = vmax.f32 %v521, 0.0
      %v585 = vmax.f32 %v524, 0.0
      %v586 = vmax.f32 %v526, 0.0
      %v587 = vmax.f32 %v529, 0.0
      %v588 = vmax.f32 %v531, 0.0
      %v589 = vmax.f32 %v534, 0.0
      %v590 = vmax.f32 %v536, 0.0
      %v591 = vmax.f32 %v539, 0.0
      %v592 = vmax.f32 %v541, 0.0
      %v593 = vmax.f32 %v544, 0.0
      %v594 = vmax.f32 %v546, 0.0
      %v595 = vmax.f32 %v549, 0.0
      %v596 = vmax.f32 %v551, 0.0
      %v597 = vmax.f32 %v554, 0.0
      %v598 = vmax.f32 %v556, 0.0
      %v599 = vmax.f32 %v559, 0.0
      %v600 = vmax.f32 %v561, 0.0
      %v601 = vmax.f32 %v564, 0.0
      %v602 = vmax.f32 %v566, 0.0
      %v603 = vmax.f32 %v569, 0.0
      %v604 = vmax.f32 %v571, 0.0
      %v605 = vpack.c.bf16 %v574, %v573
      %v606 = vpack.c.bf16 %v576, %v575
      %v607 = vpack.c.bf16 %v578, %v577
      %v608 = vpack.c.bf16 %v580, %v579
      %v609 = vpack.c.bf16 %v582, %v581
      %v610 = vpack.c.bf16 %v584, %v583
      %v611 = vpack.c.bf16 %v586, %v585
      %v612 = vpack.c.bf16 %v588, %v587
      %v613 = vpack.c.bf16 %v590, %v589
      %v614 = vpack.c.bf16 %v592, %v591
      %v615 = vpack.c.bf16 %v594, %v593
      %v616 = vpack.c.bf16 %v596, %v595
      %v617 = vpack.c.bf16 %v598, %v597
      %v618 = vpack.c.bf16 %v600, %v599
      %v619 = vpack.c.bf16 %v602, %v601
      %v620 = vpack.c.bf16 %v604, %v603
      %v621 = vperm.slane %v248, 0
      %v638 = vunpack.c.l.b16 %v227
      %v639 = vunpack.c.l.b16 %v228
      %v640 = vunpack.c.l.b16 %v229
      %v641 = vunpack.c.l.b16 %v230
      %v642 = vunpack.c.l.b16 %v231
      %v643 = vunpack.c.l.b16 %v232
      %v644 = vunpack.c.l.b16 %v233
      %v645 = vunpack.c.l.b16 %v234
      %v646 = vunpack.c.l.b16 %v235
      %v647 = vunpack.c.l.b16 %v236
      %v648 = vunpack.c.l.b16 %v237
      %v649 = vunpack.c.l.b16 %v238
      %v650 = vunpack.c.l.b16 %v239
      %v651 = vunpack.c.l.b16 %v240
      %v652 = vunpack.c.l.b16 %v241
      %v653 = vunpack.c.l.b16 %v242
      %v654 = vpack.c.b16 %v639, %v638
      %v655 = vpack.c.b16 %v641, %v640
      %v656 = vpack.c.b16 %v643, %v642
      %v657 = vpack.c.b16 %v645, %v644
      %v658 = vpack.c.b16 %v647, %v646
      %v659 = vpack.c.b16 %v649, %v648
      %v660 = vpack.c.b16 %v651, %v650
      %v661 = vpack.c.b16 %v653, %v652
      %670 = vmatpush.bf16.msra.mxu0 %v661
      %671 = vmatpush.bf16.msra.mxu0 %v660
      %672 = vmatpush.bf16.msra.mxu0 %v659
      %673 = vmatpush.bf16.msra.mxu0 %v658
      %674 = vmatpush.bf16.msra.mxu0 %v657
      %675 = vmatpush.bf16.msra.mxu0 %v656
      %676 = vmatpush.bf16.msra.mxu0 %v655
      %677 = vmatpush.bf16.msra.mxu0 %v654
      %678 = vmatmul.bf16.gmra.mxu0 %v605
      %v679 = vpop.f32.mrf.mxu0
      %v680 = vadd.f32 %v621, %v679
      %v681 = vpop.f32.mrf.mxu0
      %v682 = vadd.f32 %v621, %v681
      %683 = vmatmul.bf16.gmra.mxu0 %v606
      %v684 = vpop.f32.mrf.mxu0
      %v685 = vadd.f32 %v621, %v684
      %v686 = vpop.f32.mrf.mxu0
      %v687 = vadd.f32 %v621, %v686
      %688 = vmatmul.bf16.gmra.mxu0 %v607
      %v689 = vpop.f32.mrf.mxu0
      %v690 = vadd.f32 %v621, %v689
      %v691 = vpop.f32.mrf.mxu0
      %v692 = vadd.f32 %v621, %v691
      %693 = vmatmul.bf16.gmra.mxu0 %v608
      %v694 = vpop.f32.mrf.mxu0
      %v695 = vadd.f32 %v621, %v694
      %v696 = vpop.f32.mrf.mxu0
      %v697 = vadd.f32 %v621, %v696
      %698 = vmatmul.bf16.gmra.mxu0 %v609
      %v699 = vpop.f32.mrf.mxu0
      %v700 = vadd.f32 %v621, %v699
      %v701 = vpop.f32.mrf.mxu0
      %v702 = vadd.f32 %v621, %v701
      %703 = vmatmul.bf16.gmra.mxu0 %v610
      %v704 = vpop.f32.mrf.mxu0
      %v705 = vadd.f32 %v621, %v704
      %v706 = vpop.f32.mrf.mxu0
      %v707 = vadd.f32 %v621, %v706
      %708 = vmatmul.bf16.gmra.mxu0 %v611
      %v709 = vpop.f32.mrf.mxu0
      %v710 = vadd.f32 %v621, %v709
      %v711 = vpop.f32.mrf.mxu0
      %v712 = vadd.f32 %v621, %v711
      %713 = vmatmul.bf16.gmra.mxu0 %v612
      %v714 = vpop.f32.mrf.mxu0
      %v715 = vadd.f32 %v621, %v714
      %v716 = vpop.f32.mrf.mxu0
      %v717 = vadd.f32 %v621, %v716
      %718 = vmatmul.bf16.gmra.mxu0 %v613
      %v719 = vpop.f32.mrf.mxu0
      %v720 = vadd.f32 %v621, %v719
      %v721 = vpop.f32.mrf.mxu0
      %v722 = vadd.f32 %v621, %v721
      %723 = vmatmul.bf16.gmra.mxu0 %v614
      %v724 = vpop.f32.mrf.mxu0
      %v725 = vadd.f32 %v621, %v724
      %v726 = vpop.f32.mrf.mxu0
      %v727 = vadd.f32 %v621, %v726
      %728 = vmatmul.bf16.gmra.mxu0 %v615
      %v729 = vpop.f32.mrf.mxu0
      %v730 = vadd.f32 %v621, %v729
      %v731 = vpop.f32.mrf.mxu0
      %v732 = vadd.f32 %v621, %v731
      %733 = vmatmul.bf16.gmra.mxu0 %v616
      %v734 = vpop.f32.mrf.mxu0
      %v735 = vadd.f32 %v621, %v734
      %v736 = vpop.f32.mrf.mxu0
      %v737 = vadd.f32 %v621, %v736
      %738 = vmatmul.bf16.gmra.mxu0 %v617
      %v739 = vpop.f32.mrf.mxu0
      %v740 = vadd.f32 %v621, %v739
      %v741 = vpop.f32.mrf.mxu0
      %v742 = vadd.f32 %v621, %v741
      %743 = vmatmul.bf16.gmra.mxu0 %v618
      %v744 = vpop.f32.mrf.mxu0
      %v745 = vadd.f32 %v621, %v744
      %v746 = vpop.f32.mrf.mxu0
      %v747 = vadd.f32 %v621, %v746
      %748 = vmatmul.bf16.gmra.mxu0 %v619
      %v749 = vpop.f32.mrf.mxu0
      %v750 = vadd.f32 %v621, %v749
      %v751 = vpop.f32.mrf.mxu0
      %v752 = vadd.f32 %v621, %v751
      %753 = vmatmul.bf16.gmra.mxu0 %v620
      %v754 = vpop.f32.mrf.mxu0
      %v755 = vadd.f32 %v621, %v754
      %v756 = vpop.f32.mrf.mxu0
      %v757 = vadd.f32 %v621, %v756
      %758 = vdwg.mxu0
      %759 = vmax.xlane.f32.xlu0 %v680
      %v760 = vpop.xlane.xlu0 %759
      %761 = vmax.xlane.f32.xlu0 %v682
      %v762 = vpop.xlane.xlu0 %761
      %763 = vmax.xlane.f32.xlu0 %v685
      %v764 = vpop.xlane.xlu0 %763
      %765 = vmax.xlane.f32.xlu0 %v687
      %v766 = vpop.xlane.xlu0 %765
      %767 = vmax.xlane.f32.xlu0 %v690
      %v768 = vpop.xlane.xlu0 %767
      %769 = vmax.xlane.f32.xlu0 %v692
      %v770 = vpop.xlane.xlu0 %769
      %771 = vmax.xlane.f32.xlu0 %v695
      %v772 = vpop.xlane.xlu0 %771
      %773 = vmax.xlane.f32.xlu0 %v697
      %v774 = vpop.xlane.xlu0 %773
      %775 = vmax.xlane.f32.xlu0 %v700
      %v776 = vpop.xlane.xlu0 %775
      %777 = vmax.xlane.f32.xlu0 %v702
      %v778 = vpop.xlane.xlu0 %777
      %779 = vmax.xlane.f32.xlu0 %v705
      %v780 = vpop.xlane.xlu0 %779
      %781 = vmax.xlane.f32.xlu0 %v707
      %v782 = vpop.xlane.xlu0 %781
      %783 = vmax.xlane.f32.xlu0 %v710
      %v784 = vpop.xlane.xlu0 %783
      %785 = vmax.xlane.f32.xlu0 %v712
      %v786 = vpop.xlane.xlu0 %785
      %787 = vmax.xlane.f32.xlu0 %v715
      %v788 = vpop.xlane.xlu0 %787
      %789 = vmax.xlane.f32.xlu0 %v717
      %v790 = vpop.xlane.xlu0 %789
      %791 = vmax.xlane.f32.xlu0 %v720
      %v792 = vpop.xlane.xlu0 %791
      %793 = vmax.xlane.f32.xlu0 %v722
      %v794 = vpop.xlane.xlu0 %793
      %795 = vmax.xlane.f32.xlu0 %v725
      %v796 = vpop.xlane.xlu0 %795
      %797 = vmax.xlane.f32.xlu0 %v727
      %v798 = vpop.xlane.xlu0 %797
      %799 = vmax.xlane.f32.xlu0 %v730
      %v800 = vpop.xlane.xlu0 %799
      %801 = vmax.xlane.f32.xlu0 %v732
      %v802 = vpop.xlane.xlu0 %801
      %803 = vmax.xlane.f32.xlu0 %v735
      %v804 = vpop.xlane.xlu0 %803
      %805 = vmax.xlane.f32.xlu0 %v737
      %v806 = vpop.xlane.xlu0 %805
      %807 = vmax.xlane.f32.xlu0 %v740
      %v808 = vpop.xlane.xlu0 %807
      %809 = vmax.xlane.f32.xlu0 %v742
      %v810 = vpop.xlane.xlu0 %809
      %811 = vmax.xlane.f32.xlu0 %v745
      %v812 = vpop.xlane.xlu0 %811
      %813 = vmax.xlane.f32.xlu0 %v747
      %v814 = vpop.xlane.xlu0 %813
      %815 = vmax.xlane.f32.xlu0 %v750
      %v816 = vpop.xlane.xlu0 %815
      %817 = vmax.xlane.f32.xlu0 %v752
      %v818 = vpop.xlane.xlu0 %817
      %819 = vmax.xlane.f32.xlu0 %v755
      %v820 = vpop.xlane.xlu0 %819
      %821 = vmax.xlane.f32.xlu0 %v757
      %v822 = vpop.xlane.xlu0 %821
      %v823 = vsub.f32 %v680, %v760
      %v824 = vsub.f32 %v682, %v762
      %v825 = vsub.f32 %v685, %v764
      %v826 = vsub.f32 %v687, %v766
      %v827 = vsub.f32 %v690, %v768
      %v828 = vsub.f32 %v692, %v770
      %v829 = vsub.f32 %v695, %v772
      %v830 = vsub.f32 %v697, %v774
      %v831 = vsub.f32 %v700, %v776
      %v832 = vsub.f32 %v702, %v778
      %v833 = vsub.f32 %v705, %v780
      %v834 = vsub.f32 %v707, %v782
      %v835 = vsub.f32 %v710, %v784
      %v836 = vsub.f32 %v712, %v786
      %v837 = vsub.f32 %v715, %v788
      %v838 = vsub.f32 %v717, %v790
      %v839 = vsub.f32 %v720, %v792
      %v840 = vsub.f32 %v722, %v794
      %v841 = vsub.f32 %v725, %v796
      %v842 = vsub.f32 %v727, %v798
      %v843 = vsub.f32 %v730, %v800
      %v844 = vsub.f32 %v732, %v802
      %v845 = vsub.f32 %v735, %v804
      %v846 = vsub.f32 %v737, %v806
      %v847 = vsub.f32 %v740, %v808
      %v848 = vsub.f32 %v742, %v810
      %v849 = vsub.f32 %v745, %v812
      %v850 = vsub.f32 %v747, %v814
      %v851 = vsub.f32 %v750, %v816
      %v852 = vsub.f32 %v752, %v818
      %v853 = vsub.f32 %v755, %v820
      %v854 = vsub.f32 %v757, %v822
      %v855 = vmul.f32 %v823, 1.442695
      %v856 = vpow.pop %v855
      %v857 = vmul.f32 %v824, 1.442695
      %v858 = vpow.pop %v857
      %v859 = vmul.f32 %v825, 1.442695
      %v860 = vpow.pop %v859
      %v861 = vmul.f32 %v826, 1.442695
      %v862 = vpow.pop %v861
      %v863 = vmul.f32 %v827, 1.442695
      %v864 = vpow.pop %v863
      %v865 = vmul.f32 %v828, 1.442695
      %v866 = vpow.pop %v865
      %v867 = vmul.f32 %v829, 1.442695
      %v868 = vpow.pop %v867
      %v869 = vmul.f32 %v830, 1.442695
      %v870 = vpow.pop %v869
      %v871 = vmul.f32 %v831, 1.442695
      %v872 = vpow.pop %v871
      %v873 = vmul.f32 %v832, 1.442695
      %v874 = vpow.pop %v873
      %v875 = vmul.f32 %v833, 1.442695
      %v876 = vpow.pop %v875
      %v877 = vmul.f32 %v834, 1.442695
      %v878 = vpow.pop %v877
      %v879 = vmul.f32 %v835, 1.442695
      %v880 = vpow.pop %v879
      %v881 = vmul.f32 %v836, 1.442695
      %v882 = vpow.pop %v881
      %v883 = vmul.f32 %v837, 1.442695
      %v884 = vpow.pop %v883
      %v885 = vmul.f32 %v838, 1.442695
      %v886 = vpow.pop %v885
      %v887 = vmul.f32 %v839, 1.442695
      %v888 = vpow.pop %v887
      %v889 = vmul.f32 %v840, 1.442695
      %v890 = vpow.pop %v889
      %v891 = vmul.f32 %v841, 1.442695
      %v892 = vpow.pop %v891
      %v893 = vmul.f32 %v842, 1.442695
      %v894 = vpow.pop %v893
      %v895 = vmul.f32 %v843, 1.442695
      %v896 = vpow.pop %v895
      %v897 = vmul.f32 %v844, 1.442695
      %v898 = vpow.pop %v897
      %v899 = vmul.f32 %v845, 1.442695
      %v900 = vpow.pop %v899
      %v901 = vmul.f32 %v846, 1.442695
      %v902 = vpow.pop %v901
      %v903 = vmul.f32 %v847, 1.442695
      %v904 = vpow.pop %v903
      %v905 = vmul.f32 %v848, 1.442695
      %v906 = vpow.pop %v905
      %v907 = vmul.f32 %v849, 1.442695
      %v908 = vpow.pop %v907
      %v909 = vmul.f32 %v850, 1.442695
      %v910 = vpow.pop %v909
      %v911 = vmul.f32 %v851, 1.442695
      %v912 = vpow.pop %v911
      %v913 = vmul.f32 %v852, 1.442695
      %v914 = vpow.pop %v913
      %v915 = vmul.f32 %v853, 1.442695
      %v916 = vpow.pop %v915
      %v917 = vmul.f32 %v854, 1.442695
      %v918 = vpow.pop %v917
      %919 = vadd.xlane.f32.xlu0 %v856
      %v920 = vpop.xlane.xlu0 %919
      %921 = vadd.xlane.f32.xlu0 %v858
      %v922 = vpop.xlane.xlu0 %921
      %923 = vadd.xlane.f32.xlu0 %v860
      %v924 = vpop.xlane.xlu0 %923
      %925 = vadd.xlane.f32.xlu0 %v862
      %v926 = vpop.xlane.xlu0 %925
      %927 = vadd.xlane.f32.xlu0 %v864
      %v928 = vpop.xlane.xlu0 %927
      %929 = vadd.xlane.f32.xlu0 %v866
      %v930 = vpop.xlane.xlu0 %929
      %931 = vadd.xlane.f32.xlu0 %v868
      %v932 = vpop.xlane.xlu0 %931
      %933 = vadd.xlane.f32.xlu0 %v870
      %v934 = vpop.xlane.xlu0 %933
      %935 = vadd.xlane.f32.xlu0 %v872
      %v936 = vpop.xlane.xlu0 %935
      %937 = vadd.xlane.f32.xlu0 %v874
      %v938 = vpop.xlane.xlu0 %937
      %939 = vadd.xlane.f32.xlu0 %v876
      %v940 = vpop.xlane.xlu0 %939
      %941 = vadd.xlane.f32.xlu0 %v878
      %v942 = vpop.xlane.xlu0 %941
      %943 = vadd.xlane.f32.xlu0 %v880
      %v944 = vpop.xlane.xlu0 %943
      %945 = vadd.xlane.f32.xlu0 %v882
      %v946 = vpop.xlane.xlu0 %945
      %947 = vadd.xlane.f32.xlu0 %v884
      %v948 = vpop.xlane.xlu0 %947
      %949 = vadd.xlane.f32.xlu0 %v886
      %v950 = vpop.xlane.xlu0 %949
      %951 = vadd.xlane.f32.xlu0 %v888
      %v952 = vpop.xlane.xlu0 %951
      %953 = vadd.xlane.f32.xlu0 %v890
      %v954 = vpop.xlane.xlu0 %953
      %955 = vadd.xlane.f32.xlu0 %v892
      %v956 = vpop.xlane.xlu0 %955
      %957 = vadd.xlane.f32.xlu0 %v894
      %v958 = vpop.xlane.xlu0 %957
      %959 = vadd.xlane.f32.xlu0 %v896
      %v960 = vpop.xlane.xlu0 %959
      %961 = vadd.xlane.f32.xlu0 %v898
      %v962 = vpop.xlane.xlu0 %961
      %963 = vadd.xlane.f32.xlu0 %v900
      %v964 = vpop.xlane.xlu0 %963
      %965 = vadd.xlane.f32.xlu0 %v902
      %v966 = vpop.xlane.xlu0 %965
      %967 = vadd.xlane.f32.xlu0 %v904
      %v968 = vpop.xlane.xlu0 %967
      %969 = vadd.xlane.f32.xlu0 %v906
      %v970 = vpop.xlane.xlu0 %969
      %971 = vadd.xlane.f32.xlu0 %v908
      %v972 = vpop.xlane.xlu0 %971
      %973 = vadd.xlane.f32.xlu0 %v910
      %v974 = vpop.xlane.xlu0 %973
      %975 = vadd.xlane.f32.xlu0 %v912
      %v976 = vpop.xlane.xlu0 %975
      %977 = vadd.xlane.f32.xlu0 %v914
      %v978 = vpop.xlane.xlu0 %977
      %979 = vadd.xlane.f32.xlu0 %v916
      %v980 = vpop.xlane.xlu0 %979
      %981 = vadd.xlane.f32.xlu0 %v918
      %v982 = vpop.xlane.xlu0 %981
      %v983 = vrcp.pop %v920
      %v984 = vmul.f32 %v920, %v983
      %v985 = vsub.f32 1.0, %v984
      %v986 = vmul.f32 %v983, %v985
      %v987 = vadd.f32 %v983, %v986
      %vm988 = vweird.f32 %v920
      %vm989 = vweird.f32 %v983
      %vm990 = vmor %vm988, %vm989
      %v991 = vsel %vm990, %v983, %v987
      %v992 = vand.u32 2147483647, %v920
      %vm993 = vcmp.eq.f32.partialorder %v992, 8.507059e+37
      %v994 = vand.u32 %v920, 2147483648
      %v995 = vor.u32 1.1754944e-38, %v994
      %v996 = vsel %vm993, %v995, %v991
      %v997 = vrcp.pop %v922
      %v998 = vmul.f32 %v922, %v997
      %v999 = vsub.f32 1.0, %v998
      %v1000 = vmul.f32 %v997, %v999
      %v1001 = vadd.f32 %v997, %v1000
      %vm1002 = vweird.f32 %v922
      %vm1003 = vweird.f32 %v997
      %vm1004 = vmor %vm1002, %vm1003
      %v1005 = vsel %vm1004, %v997, %v1001
      %v1006 = vand.u32 2147483647, %v922
      %vm1007 = vcmp.eq.f32.partialorder %v1006, 8.507059e+37
      %v1008 = vand.u32 %v922, 2147483648
      %v1009 = vor.u32 1.1754944e-38, %v1008
      %v1010 = vsel %vm1007, %v1009, %v1005
      %v1011 = vrcp.pop %v924
      %v1012 = vmul.f32 %v924, %v1011
      %v1013 = vsub.f32 1.0, %v1012
      %v1014 = vmul.f32 %v1011, %v1013
      %v1015 = vadd.f32 %v1011, %v1014
      %vm1016 = vweird.f32 %v924
      %vm1017 = vweird.f32 %v1011
      %vm1018 = vmor %vm1016, %vm1017
      %v1019 = vsel %vm1018, %v1011, %v1015
      %v1020 = vand.u32 2147483647, %v924
      %vm1021 = vcmp.eq.f32.partialorder %v1020, 8.507059e+37
      %v1022 = vand.u32 %v924, 2147483648
      %v1023 = vor.u32 1.1754944e-38, %v1022
      %v1024 = vsel %vm1021, %v1023, %v1019
      %v1025 = vrcp.pop %v926
      %v1026 = vmul.f32 %v926, %v1025
      %v1027 = vsub.f32 1.0, %v1026
      %v1028 = vmul.f32 %v1025, %v1027
      %v1029 = vadd.f32 %v1025, %v1028
      %vm1030 = vweird.f32 %v926
      %vm1031 = vweird.f32 %v1025
      %vm1032 = vmor %vm1030, %vm1031
      %v1033 = vsel %vm1032, %v1025, %v1029
      %v1034 = vand.u32 2147483647, %v926
      %vm1035 = vcmp.eq.f32.partialorder %v1034, 8.507059e+37
      %v1036 = vand.u32 %v926, 2147483648
      %v1037 = vor.u32 1.1754944e-38, %v1036
      %v1038 = vsel %vm1035, %v1037, %v1033
      %v1039 = vrcp.pop %v928
      %v1040 = vmul.f32 %v928, %v1039
      %v1041 = vsub.f32 1.0, %v1040
      %v1042 = vmul.f32 %v1039, %v1041
      %v1043 = vadd.f32 %v1039, %v1042
      %vm1044 = vweird.f32 %v928
      %vm1045 = vweird.f32 %v1039
      %vm1046 = vmor %vm1044, %vm1045
      %v1047 = vsel %vm1046, %v1039, %v1043
      %v1048 = vand.u32 2147483647, %v928
      %vm1049 = vcmp.eq.f32.partialorder %v1048, 8.507059e+37
      %v1050 = vand.u32 %v928, 2147483648
      %v1051 = vor.u32 1.1754944e-38, %v1050
      %v1052 = vsel %vm1049, %v1051, %v1047
      %v1053 = vrcp.pop %v930
      %v1054 = vmul.f32 %v930, %v1053
      %v1055 = vsub.f32 1.0, %v1054
      %v1056 = vmul.f32 %v1053, %v1055
      %v1057 = vadd.f32 %v1053, %v1056
      %vm1058 = vweird.f32 %v930
      %vm1059 = vweird.f32 %v1053
      %vm1060 = vmor %vm1058, %vm1059
      %v1061 = vsel %vm1060, %v1053, %v1057
      %v1062 = vand.u32 2147483647, %v930
      %vm1063 = vcmp.eq.f32.partialorder %v1062, 8.507059e+37
      %v1064 = vand.u32 %v930, 2147483648
      %v1065 = vor.u32 1.1754944e-38, %v1064
      %v1066 = vsel %vm1063, %v1065, %v1061
      %v1067 = vrcp.pop %v932
      %v1068 = vmul.f32 %v932, %v1067
      %v1069 = vsub.f32 1.0, %v1068
      %v1070 = vmul.f32 %v1067, %v1069
      %v1071 = vadd.f32 %v1067, %v1070
      %vm1072 = vweird.f32 %v932
      %vm1073 = vweird.f32 %v1067
      %vm1074 = vmor %vm1072, %vm1073
      %v1075 = vsel %vm1074, %v1067, %v1071
      %v1076 = vand.u32 2147483647, %v932
      %vm1077 = vcmp.eq.f32.partialorder %v1076, 8.507059e+37
      %v1078 = vand.u32 %v932, 2147483648
      %v1079 = vor.u32 1.1754944e-38, %v1078
      %v1080 = vsel %vm1077, %v1079, %v1075
      %v1081 = vrcp.pop %v934
      %v1082 = vmul.f32 %v934, %v1081
      %v1083 = vsub.f32 1.0, %v1082
      %v1084 = vmul.f32 %v1081, %v1083
      %v1085 = vadd.f32 %v1081, %v1084
      %vm1086 = vweird.f32 %v934
      %vm1087 = vweird.f32 %v1081
      %vm1088 = vmor %vm1086, %vm1087
      %v1089 = vsel %vm1088, %v1081, %v1085
      %v1090 = vand.u32 2147483647, %v934
      %vm1091 = vcmp.eq.f32.partialorder %v1090, 8.507059e+37
      %v1092 = vand.u32 %v934, 2147483648
      %v1093 = vor.u32 1.1754944e-38, %v1092
      %v1094 = vsel %vm1091, %v1093, %v1089
      %v1095 = vrcp.pop %v936
      %v1096 = vmul.f32 %v936, %v1095
      %v1097 = vsub.f32 1.0, %v1096
      %v1098 = vmul.f32 %v1095, %v1097
      %v1099 = vadd.f32 %v1095, %v1098
      %vm1100 = vweird.f32 %v936
      %vm1101 = vweird.f32 %v1095
      %vm1102 = vmor %vm1100, %vm1101
      %v1103 = vsel %vm1102, %v1095, %v1099
      %v1104 = vand.u32 2147483647, %v936
      %vm1105 = vcmp.eq.f32.partialorder %v1104, 8.507059e+37
      %v1106 = vand.u32 %v936, 2147483648
      %v1107 = vor.u32 1.1754944e-38, %v1106
      %v1108 = vsel %vm1105, %v1107, %v1103
      %v1109 = vrcp.pop %v938
      %v1110 = vmul.f32 %v938, %v1109
      %v1111 = vsub.f32 1.0, %v1110
      %v1112 = vmul.f32 %v1109, %v1111
      %v1113 = vadd.f32 %v1109, %v1112
      %vm1114 = vweird.f32 %v938
      %vm1115 = vweird.f32 %v1109
      %vm1116 = vmor %vm1114, %vm1115
      %v1117 = vsel %vm1116, %v1109, %v1113
      %v1118 = vand.u32 2147483647, %v938
      %vm1119 = vcmp.eq.f32.partialorder %v1118, 8.507059e+37
      %v1120 = vand.u32 %v938, 2147483648
      %v1121 = vor.u32 1.1754944e-38, %v1120
      %v1122 = vsel %vm1119, %v1121, %v1117
      %v1123 = vrcp.pop %v940
      %v1124 = vmul.f32 %v940, %v1123
      %v1125 = vsub.f32 1.0, %v1124
      %v1126 = vmul.f32 %v1123, %v1125
      %v1127 = vadd.f32 %v1123, %v1126
      %vm1128 = vweird.f32 %v940
      %vm1129 = vweird.f32 %v1123
      %vm1130 = vmor %vm1128, %vm1129
      %v1131 = vsel %vm1130, %v1123, %v1127
      %v1132 = vand.u32 2147483647, %v940
      %vm1133 = vcmp.eq.f32.partialorder %v1132, 8.507059e+37
      %v1134 = vand.u32 %v940, 2147483648
      %v1135 = vor.u32 1.1754944e-38, %v1134
      %v1136 = vsel %vm1133, %v1135, %v1131
      %v1137 = vrcp.pop %v942
      %v1138 = vmul.f32 %v942, %v1137
      %v1139 = vsub.f32 1.0, %v1138
      %v1140 = vmul.f32 %v1137, %v1139
      %v1141 = vadd.f32 %v1137, %v1140
      %vm1142 = vweird.f32 %v942
      %vm1143 = vweird.f32 %v1137
      %vm1144 = vmor %vm1142, %vm1143
      %v1145 = vsel %vm1144, %v1137, %v1141
      %v1146 = vand.u32 2147483647, %v942
      %vm1147 = vcmp.eq.f32.partialorder %v1146, 8.507059e+37
      %v1148 = vand.u32 %v942, 2147483648
      %v1149 = vor.u32 1.1754944e-38, %v1148
      %v1150 = vsel %vm1147, %v1149, %v1145
      %v1151 = vrcp.pop %v944
      %v1152 = vmul.f32 %v944, %v1151
      %v1153 = vsub.f32 1.0, %v1152
      %v1154 = vmul.f32 %v1151, %v1153
      %v1155 = vadd.f32 %v1151, %v1154
      %vm1156 = vweird.f32 %v944
      %vm1157 = vweird.f32 %v1151
      %vm1158 = vmor %vm1156, %vm1157
      %v1159 = vsel %vm1158, %v1151, %v1155
      %v1160 = vand.u32 2147483647, %v944
      %vm1161 = vcmp.eq.f32.partialorder %v1160, 8.507059e+37
      %v1162 = vand.u32 %v944, 2147483648
      %v1163 = vor.u32 1.1754944e-38, %v1162
      %v1164 = vsel %vm1161, %v1163, %v1159
      %v1165 = vrcp.pop %v946
      %v1166 = vmul.f32 %v946, %v1165
      %v1167 = vsub.f32 1.0, %v1166
      %v1168 = vmul.f32 %v1165, %v1167
      %v1169 = vadd.f32 %v1165, %v1168
      %vm1170 = vweird.f32 %v946
      %vm1171 = vweird.f32 %v1165
      %vm1172 = vmor %vm1170, %vm1171
      %v1173 = vsel %vm1172, %v1165, %v1169
      %v1174 = vand.u32 2147483647, %v946
      %vm1175 = vcmp.eq.f32.partialorder %v1174, 8.507059e+37
      %v1176 = vand.u32 %v946, 2147483648
      %v1177 = vor.u32 1.1754944e-38, %v1176
      %v1178 = vsel %vm1175, %v1177, %v1173
      %v1179 = vrcp.pop %v948
      %v1180 = vmul.f32 %v948, %v1179
      %v1181 = vsub.f32 1.0, %v1180
      %v1182 = vmul.f32 %v1179, %v1181
      %v1183 = vadd.f32 %v1179, %v1182
      %vm1184 = vweird.f32 %v948
      %vm1185 = vweird.f32 %v1179
      %vm1186 = vmor %vm1184, %vm1185
      %v1187 = vsel %vm1186, %v1179, %v1183
      %v1188 = vand.u32 2147483647, %v948
      %vm1189 = vcmp.eq.f32.partialorder %v1188, 8.507059e+37
      %v1190 = vand.u32 %v948, 2147483648
      %v1191 = vor.u32 1.1754944e-38, %v1190
      %v1192 = vsel %vm1189, %v1191, %v1187
      %v1193 = vrcp.pop %v950
      %v1194 = vmul.f32 %v950, %v1193
      %v1195 = vsub.f32 1.0, %v1194
      %v1196 = vmul.f32 %v1193, %v1195
      %v1197 = vadd.f32 %v1193, %v1196
      %vm1198 = vweird.f32 %v950
      %vm1199 = vweird.f32 %v1193
      %vm1200 = vmor %vm1198, %vm1199
      %v1201 = vsel %vm1200, %v1193, %v1197
      %v1202 = vand.u32 2147483647, %v950
      %vm1203 = vcmp.eq.f32.partialorder %v1202, 8.507059e+37
      %v1204 = vand.u32 %v950, 2147483648
      %v1205 = vor.u32 1.1754944e-38, %v1204
      %v1206 = vsel %vm1203, %v1205, %v1201
      %v1207 = vrcp.pop %v952
      %v1208 = vmul.f32 %v952, %v1207
      %v1209 = vsub.f32 1.0, %v1208
      %v1210 = vmul.f32 %v1207, %v1209
      %v1211 = vadd.f32 %v1207, %v1210
      %vm1212 = vweird.f32 %v952
      %vm1213 = vweird.f32 %v1207
      %vm1214 = vmor %vm1212, %vm1213
      %v1215 = vsel %vm1214, %v1207, %v1211
      %v1216 = vand.u32 2147483647, %v952
      %vm1217 = vcmp.eq.f32.partialorder %v1216, 8.507059e+37
      %v1218 = vand.u32 %v952, 2147483648
      %v1219 = vor.u32 1.1754944e-38, %v1218
      %v1220 = vsel %vm1217, %v1219, %v1215
      %v1221 = vrcp.pop %v954
      %v1222 = vmul.f32 %v954, %v1221
      %v1223 = vsub.f32 1.0, %v1222
      %v1224 = vmul.f32 %v1221, %v1223
      %v1225 = vadd.f32 %v1221, %v1224
      %vm1226 = vweird.f32 %v954
      %vm1227 = vweird.f32 %v1221
      %vm1228 = vmor %vm1226, %vm1227
      %v1229 = vsel %vm1228, %v1221, %v1225
      %v1230 = vand.u32 2147483647, %v954
      %vm1231 = vcmp.eq.f32.partialorder %v1230, 8.507059e+37
      %v1232 = vand.u32 %v954, 2147483648
      %v1233 = vor.u32 1.1754944e-38, %v1232
      %v1234 = vsel %vm1231, %v1233, %v1229
      %v1235 = vrcp.pop %v956
      %v1236 = vmul.f32 %v956, %v1235
      %v1237 = vsub.f32 1.0, %v1236
      %v1238 = vmul.f32 %v1235, %v1237
      %v1239 = vadd.f32 %v1235, %v1238
      %vm1240 = vweird.f32 %v956
      %vm1241 = vweird.f32 %v1235
      %vm1242 = vmor %vm1240, %vm1241
      %v1243 = vsel %vm1242, %v1235, %v1239
      %v1244 = vand.u32 2147483647, %v956
      %vm1245 = vcmp.eq.f32.partialorder %v1244, 8.507059e+37
      %v1246 = vand.u32 %v956, 2147483648
      %v1247 = vor.u32 1.1754944e-38, %v1246
      %v1248 = vsel %vm1245, %v1247, %v1243
      %v1249 = vrcp.pop %v958
      %v1250 = vmul.f32 %v958, %v1249
      %v1251 = vsub.f32 1.0, %v1250
      %v1252 = vmul.f32 %v1249, %v1251
      %v1253 = vadd.f32 %v1249, %v1252
      %vm1254 = vweird.f32 %v958
      %vm1255 = vweird.f32 %v1249
      %vm1256 = vmor %vm1254, %vm1255
      %v1257 = vsel %vm1256, %v1249, %v1253
      %v1258 = vand.u32 2147483647, %v958
      %vm1259 = vcmp.eq.f32.partialorder %v1258, 8.507059e+37
      %v1260 = vand.u32 %v958, 2147483648
      %v1261 = vor.u32 1.1754944e-38, %v1260
      %v1262 = vsel %vm1259, %v1261, %v1257
      %v1263 = vrcp.pop %v960
      %v1264 = vmul.f32 %v960, %v1263
      %v1265 = vsub.f32 1.0, %v1264
      %v1266 = vmul.f32 %v1263, %v1265
      %v1267 = vadd.f32 %v1263, %v1266
      %vm1268 = vweird.f32 %v960
      %vm1269 = vweird.f32 %v1263
      %vm1270 = vmor %vm1268, %vm1269
      %v1271 = vsel %vm1270, %v1263, %v1267
      %v1272 = vand.u32 2147483647, %v960
      %vm1273 = vcmp.eq.f32.partialorder %v1272, 8.507059e+37
      %v1274 = vand.u32 %v960, 2147483648
      %v1275 = vor.u32 1.1754944e-38, %v1274
      %v1276 = vsel %vm1273, %v1275, %v1271
      %v1277 = vrcp.pop %v962
      %v1278 = vmul.f32 %v962, %v1277
      %v1279 = vsub.f32 1.0, %v1278
      %v1280 = vmul.f32 %v1277, %v1279
      %v1281 = vadd.f32 %v1277, %v1280
      %vm1282 = vweird.f32 %v962
      %vm1283 = vweird.f32 %v1277
      %vm1284 = vmor %vm1282, %vm1283
      %v1285 = vsel %vm1284, %v1277, %v1281
      %v1286 = vand.u32 2147483647, %v962
      %vm1287 = vcmp.eq.f32.partialorder %v1286, 8.507059e+37
      %v1288 = vand.u32 %v962, 2147483648
      %v1289 = vor.u32 1.1754944e-38, %v1288
      %v1290 = vsel %vm1287, %v1289, %v1285
      %v1291 = vrcp.pop %v964
      %v1292 = vmul.f32 %v964, %v1291
      %v1293 = vsub.f32 1.0, %v1292
      %v1294 = vmul.f32 %v1291, %v1293
      %v1295 = vadd.f32 %v1291, %v1294
      %vm1296 = vweird.f32 %v964
      %vm1297 = vweird.f32 %v1291
      %vm1298 = vmor %vm1296, %vm1297
      %v1299 = vsel %vm1298, %v1291, %v1295
      %v1300 = vand.u32 2147483647, %v964
      %vm1301 = vcmp.eq.f32.partialorder %v1300, 8.507059e+37
      %v1302 = vand.u32 %v964, 2147483648
      %v1303 = vor.u32 1.1754944e-38, %v1302
      %v1304 = vsel %vm1301, %v1303, %v1299
      %v1305 = vrcp.pop %v966
      %v1306 = vmul.f32 %v966, %v1305
      %v1307 = vsub.f32 1.0, %v1306
      %v1308 = vmul.f32 %v1305, %v1307
      %v1309 = vadd.f32 %v1305, %v1308
      %vm1310 = vweird.f32 %v966
      %vm1311 = vweird.f32 %v1305
      %vm1312 = vmor %vm1310, %vm1311
      %v1313 = vsel %vm1312, %v1305, %v1309
      %v1314 = vand.u32 2147483647, %v966
      %vm1315 = vcmp.eq.f32.partialorder %v1314, 8.507059e+37
      %v1316 = vand.u32 %v966, 2147483648
      %v1317 = vor.u32 1.1754944e-38, %v1316
      %v1318 = vsel %vm1315, %v1317, %v1313
      %v1319 = vrcp.pop %v968
      %v1320 = vmul.f32 %v968, %v1319
      %v1321 = vsub.f32 1.0, %v1320
      %v1322 = vmul.f32 %v1319, %v1321
      %v1323 = vadd.f32 %v1319, %v1322
      %vm1324 = vweird.f32 %v968
      %vm1325 = vweird.f32 %v1319
      %vm1326 = vmor %vm1324, %vm1325
      %v1327 = vsel %vm1326, %v1319, %v1323
      %v1328 = vand.u32 2147483647, %v968
      %vm1329 = vcmp.eq.f32.partialorder %v1328, 8.507059e+37
      %v1330 = vand.u32 %v968, 2147483648
      %v1331 = vor.u32 1.1754944e-38, %v1330
      %v1332 = vsel %vm1329, %v1331, %v1327
      %v1333 = vrcp.pop %v970
      %v1334 = vmul.f32 %v970, %v1333
      %v1335 = vsub.f32 1.0, %v1334
      %v1336 = vmul.f32 %v1333, %v1335
      %v1337 = vadd.f32 %v1333, %v1336
      %vm1338 = vweird.f32 %v970
      %vm1339 = vweird.f32 %v1333
      %vm1340 = vmor %vm1338, %vm1339
      %v1341 = vsel %vm1340, %v1333, %v1337
      %v1342 = vand.u32 2147483647, %v970
      %vm1343 = vcmp.eq.f32.partialorder %v1342, 8.507059e+37
      %v1344 = vand.u32 %v970, 2147483648
      %v1345 = vor.u32 1.1754944e-38, %v1344
      %v1346 = vsel %vm1343, %v1345, %v1341
      %v1347 = vrcp.pop %v972
      %v1348 = vmul.f32 %v972, %v1347
      %v1349 = vsub.f32 1.0, %v1348
      %v1350 = vmul.f32 %v1347, %v1349
      %v1351 = vadd.f32 %v1347, %v1350
      %vm1352 = vweird.f32 %v972
      %vm1353 = vweird.f32 %v1347
      %vm1354 = vmor %vm1352, %vm1353
      %v1355 = vsel %vm1354, %v1347, %v1351
      %v1356 = vand.u32 2147483647, %v972
      %vm1357 = vcmp.eq.f32.partialorder %v1356, 8.507059e+37
      %v1358 = vand.u32 %v972, 2147483648
      %v1359 = vor.u32 1.1754944e-38, %v1358
      %v1360 = vsel %vm1357, %v1359, %v1355
      %v1361 = vrcp.pop %v974
      %v1362 = vmul.f32 %v974, %v1361
      %v1363 = vsub.f32 1.0, %v1362
      %v1364 = vmul.f32 %v1361, %v1363
      %v1365 = vadd.f32 %v1361, %v1364
      %vm1366 = vweird.f32 %v974
      %vm1367 = vweird.f32 %v1361
      %vm1368 = vmor %vm1366, %vm1367
      %v1369 = vsel %vm1368, %v1361, %v1365
      %v1370 = vand.u32 2147483647, %v974
      %vm1371 = vcmp.eq.f32.partialorder %v1370, 8.507059e+37
      %v1372 = vand.u32 %v974, 2147483648
      %v1373 = vor.u32 1.1754944e-38, %v1372
      %v1374 = vsel %vm1371, %v1373, %v1369
      %v1375 = vrcp.pop %v976
      %v1376 = vmul.f32 %v976, %v1375
      %v1377 = vsub.f32 1.0, %v1376
      %v1378 = vmul.f32 %v1375, %v1377
      %v1379 = vadd.f32 %v1375, %v1378
      %vm1380 = vweird.f32 %v976
      %vm1381 = vweird.f32 %v1375
      %vm1382 = vmor %vm1380, %vm1381
      %v1383 = vsel %vm1382, %v1375, %v1379
      %v1384 = vand.u32 2147483647, %v976
      %vm1385 = vcmp.eq.f32.partialorder %v1384, 8.507059e+37
      %v1386 = vand.u32 %v976, 2147483648
      %v1387 = vor.u32 1.1754944e-38, %v1386
      %v1388 = vsel %vm1385, %v1387, %v1383
      %v1389 = vrcp.pop %v978
      %v1390 = vmul.f32 %v978, %v1389
      %v1391 = vsub.f32 1.0, %v1390
      %v1392 = vmul.f32 %v1389, %v1391
      %v1393 = vadd.f32 %v1389, %v1392
      %vm1394 = vweird.f32 %v978
      %vm1395 = vweird.f32 %v1389
      %vm1396 = vmor %vm1394, %vm1395
      %v1397 = vsel %vm1396, %v1389, %v1393
      %v1398 = vand.u32 2147483647, %v978
      %vm1399 = vcmp.eq.f32.partialorder %v1398, 8.507059e+37
      %v1400 = vand.u32 %v978, 2147483648
      %v1401 = vor.u32 1.1754944e-38, %v1400
      %v1402 = vsel %vm1399, %v1401, %v1397
      %v1403 = vrcp.pop %v980
      %v1404 = vmul.f32 %v980, %v1403
      %v1405 = vsub.f32 1.0, %v1404
      %v1406 = vmul.f32 %v1403, %v1405
      %v1407 = vadd.f32 %v1403, %v1406
      %vm1408 = vweird.f32 %v980
      %vm1409 = vweird.f32 %v1403
      %vm1410 = vmor %vm1408, %vm1409
      %v1411 = vsel %vm1410, %v1403, %v1407
      %v1412 = vand.u32 2147483647, %v980
      %vm1413 = vcmp.eq.f32.partialorder %v1412, 8.507059e+37
      %v1414 = vand.u32 %v980, 2147483648
      %v1415 = vor.u32 1.1754944e-38, %v1414
      %v1416 = vsel %vm1413, %v1415, %v1411
      %v1417 = vrcp.pop %v982
      %v1418 = vmul.f32 %v982, %v1417
      %v1419 = vsub.f32 1.0, %v1418
      %v1420 = vmul.f32 %v1417, %v1419
      %v1421 = vadd.f32 %v1417, %v1420
      %vm1422 = vweird.f32 %v982
      %vm1423 = vweird.f32 %v1417
      %vm1424 = vmor %vm1422, %vm1423
      %v1425 = vsel %vm1424, %v1417, %v1421
      %v1426 = vand.u32 2147483647, %v982
      %vm1427 = vcmp.eq.f32.partialorder %v1426, 8.507059e+37
      %v1428 = vand.u32 %v982, 2147483648
      %v1429 = vor.u32 1.1754944e-38, %v1428
      %v1430 = vsel %vm1427, %v1429, %v1425
      %v1431 = vmul.f32 %v856, %v996
      %v1432 = vmul.f32 %v858, %v1010
      %v1433 = vmul.f32 %v860, %v1024
      %v1434 = vmul.f32 %v862, %v1038
      %v1435 = vmul.f32 %v864, %v1052
      %v1436 = vmul.f32 %v866, %v1066
      %v1437 = vmul.f32 %v868, %v1080
      %v1438 = vmul.f32 %v870, %v1094
      %v1439 = vmul.f32 %v872, %v1108
      %v1440 = vmul.f32 %v874, %v1122
      %v1441 = vmul.f32 %v876, %v1136
      %v1442 = vmul.f32 %v878, %v1150
      %v1443 = vmul.f32 %v880, %v1164
      %v1444 = vmul.f32 %v882, %v1178
      %v1445 = vmul.f32 %v884, %v1192
      %v1446 = vmul.f32 %v886, %v1206
      %v1447 = vmul.f32 %v888, %v1220
      %v1448 = vmul.f32 %v890, %v1234
      %v1449 = vmul.f32 %v892, %v1248
      %v1450 = vmul.f32 %v894, %v1262
      %v1451 = vmul.f32 %v896, %v1276
      %v1452 = vmul.f32 %v898, %v1290
      %v1453 = vmul.f32 %v900, %v1304
      %v1454 = vmul.f32 %v902, %v1318
      %v1455 = vmul.f32 %v904, %v1332
      %v1456 = vmul.f32 %v906, %v1346
      %v1457 = vmul.f32 %v908, %v1360
      %v1458 = vmul.f32 %v910, %v1374
      %v1459 = vmul.f32 %v912, %v1388
      %v1460 = vmul.f32 %v914, %v1402
      %v1461 = vmul.f32 %v916, %v1416
      %v1462 = vmul.f32 %v918, %v1430
      %1463 = vst [vmem:[%s145] sm:$0xff] %v1431
      %1464 = vst [vmem:[%s145 + $0x8] sm:$0xff] %v1432
      %1465 = vst [vmem:[%s145 + $0x10] sm:$0xff] %v1433
      %1466 = vst [vmem:[%s145 + $0x18] sm:$0xff] %v1434
      %1467 = vst [vmem:[%s145 + $0x20] sm:$0xff] %v1435
      %1468 = vst [vmem:[%s145 + $0x28] sm:$0xff] %v1436
      %1469 = vst [vmem:[%s145 + $0x30] sm:$0xff] %v1437
      %1470 = vst [vmem:[%s145 + $0x38] sm:$0xff] %v1438
      %1471 = vst [vmem:[%s145 + $0x40] sm:$0xff] %v1439
      %1472 = vst [vmem:[%s145 + $0x48] sm:$0xff] %v1440
      %1473 = vst [vmem:[%s145 + $0x50] sm:$0xff] %v1441
      %1474 = vst [vmem:[%s145 + $0x58] sm:$0xff] %v1442
      %1475 = vst [vmem:[%s145 + $0x60] sm:$0xff] %v1443
      %1476 = vst [vmem:[%s145 + $0x68] sm:$0xff] %v1444
      %1477 = vst [vmem:[%s145 + $0x70] sm:$0xff] %v1445
      %1478 = vst [vmem:[%s145 + $0x78] sm:$0xff] %v1446
      %1479 = vst [vmem:[%s145 + $0x80] sm:$0xff] %v1447
      %1480 = vst [vmem:[%s145 + $0x88] sm:$0xff] %v1448
      %1481 = vst [vmem:[%s145 + $0x90] sm:$0xff] %v1449
      %1482 = vst [vmem:[%s145 + $0x98] sm:$0xff] %v1450
      %1483 = vst [vmem:[%s145 + $0xa0] sm:$0xff] %v1451
      %1484 = vst [vmem:[%s145 + $0xa8] sm:$0xff] %v1452
      %1485 = vst [vmem:[%s145 + $0xb0] sm:$0xff] %v1453
      %1486 = vst [vmem:[%s145 + $0xb8] sm:$0xff] %v1454
      %1487 = vst [vmem:[%s145 + $0xc0] sm:$0xff] %v1455
      %1488 = vst [vmem:[%s145 + $0xc8] sm:$0xff] %v1456
      %1489 = vst [vmem:[%s145 + $0xd0] sm:$0xff] %v1457
      %1490 = vst [vmem:[%s145 + $0xd8] sm:$0xff] %v1458
      %1491 = vst [vmem:[%s145 + $0xe0] sm:$0xff] %v1459
      %1492 = vst [vmem:[%s145 + $0xe8] sm:$0xff] %v1460
      %1493 = vst [vmem:[%s145 + $0xf0] sm:$0xff] %v1461
      %1494 = vst [vmem:[%s145 + $0xf8] sm:$0xff] %v1462
      %s1495 = smul.u32 32, %s13
      %p1496 = scmp.lt.s32.totalorder %s1495, 63
      %s1497 = scalar_select %p1496, %s1495, 63
      %s1498 = smul.addr %s1497, 8
      %s1499 = scalar_lea.vmem %s2, %s1498
      // Predicated region
      $region29: #{policy_forward.1} parent=27 // pred_check
        %p1500 = pneg %p78
      $region30: #{policy_forward.1} parent=27 // pred_check_branch
        %1502 = sbr.rel (%p1500) target = $region32
      $region31: #{policy_forward.1} parent=27 // pred_region
        %s1503 = smul.u32 32, %s13
      $region32: #{policy_forward.1} parent=27 // pred_fallthru
        _
    $region28: #{policy_forward.1} parent=5 // pred_fallthru
      _
    %p1504 = scmp.le.s32.totalorder 2, %s8
    // Predicated region
    $region33: #{policy_forward.1} parent=5 // pred_check
      %p1505 = pneg %p1504
    $region34: #{policy_forward.1} parent=5 // pred_check_branch
      %1507 = sbr.rel (%p1505) target = $region36
    $region35: #{policy_forward.1} parent=5 // pred_region
      %s1508 = ssub.s32 %s8, 2
      // Predicated region
      $region37: #{policy_forward.1} parent=35 // pred_check
        %p1509 = pneg %p84
      $region38: #{policy_forward.1} parent=35 // pred_check_branch
        %1511 = sbr.rel (%p1509) target = $region40
      $region39: #{policy_forward.1} parent=35 // pred_region
        %s1512 = smul.u32 32, %s14
        %p1513 = scmp.lt.s32.totalorder %s1512, 63
        %s1514 = scalar_select %p1513, %s1512, 63
        %s1515 = smul.addr %s1514, 8
        %s1516 = scalar_lea.vmem %s2, %s1515
      $region40: #{policy_forward.1} parent=35 // pred_fallthru
        _
    $region36: #{policy_forward.1} parent=5 // pred_fallthru
      _
  $region6: #{policy_forward.1} parent=0 // loop_footer
    %s12 = sadd.s32 1, %s8
  $region7: #{policy_forward.1} parent=0 // loop_footer_branch
    %7 = sbr.rel target = $region3
  $region8: #{policy_forward.1} parent=0 // loop_exit
    _

</llo_original>
